<compile_context>
chip_gen: v7x
topology: tpu7x:2x2x1
jax: 0.10.0
libtpu: 0.0.40
codegen_flags: <defaults>
</compile_context>

<pallas_src>
import jax
import jax.numpy as jnp
import numpy as np
from jax.experimental import pallas as pl
from jax.experimental.pallas import tpu as pltpu

EPS = 1e-5
HI = jax.lax.Precision.HIGHEST


def _layer_norm(x, w, b):
    mu = jnp.mean(x, axis=-1, keepdims=True)
    var = jnp.mean(jnp.square(x - mu), axis=-1, keepdims=True)
    return (x - mu) * jax.lax.rsqrt(var + EPS) * w + b


# ---------------------------------------------------------------------------
# Pass 1: self_attn_layer_norm + fused Q/K/V projection (bf16 MXU, f32 acc).
# ---------------------------------------------------------------------------
def qkv_kernel(x_ref, ln1_w_ref, ln1_b_ref,
               wq_ref, bq_ref, wk_ref, wv_ref, bv_ref,
               q_ref, k_ref, v_ref):
    x = x_ref[0].astype(jnp.float32)                           # (ts, D)
    h = _layer_norm(x, ln1_w_ref[...], ln1_b_ref[...])
    hb = h.astype(jnp.bfloat16)

    # head_dim**-0.5 is pre-folded into wq / bq outside the kernel.
    q = jnp.dot(hb, wq_ref[...], preferred_element_type=jnp.float32) + bq_ref[...]
    k = jnp.dot(hb, wk_ref[...], preferred_element_type=jnp.float32)   # no k bias
    v = jnp.dot(hb, wv_ref[...], preferred_element_type=jnp.float32) + bv_ref[...]

    q_ref[0] = q.astype(q_ref.dtype)
    k_ref[0] = k.astype(k_ref.dtype)
    v_ref[0] = v.astype(v_ref.dtype)


# ---------------------------------------------------------------------------
# Pass 2: flash attention (heads batched) + out proj + residual + LN2 + MLP.
# ---------------------------------------------------------------------------
def attn_ffn_kernel(x_ref, mask_ref, q_ref, k_ref, v_ref,
                    wo_ref, bo_ref, ln2_w_ref, ln2_b_ref,
                    w1_ref, b1_ref, w2_ref, b2_ref,
                    out_ref,
                    m_sc, l_sc, acc_sc):
    kv = pl.program_id(2)

    @pl.when(kv == 0)
    def _init():
        m_sc[...] = jnp.full(m_sc.shape, -jnp.inf, jnp.float32)
        l_sc[...] = jnp.zeros(l_sc.shape, jnp.float32)
        acc_sc[...] = jnp.zeros(acc_sc.shape, jnp.float32)

    q = q_ref[0]                                               # (H, tq, hd) bf16
    k = k_ref[0]                                               # (H, tk, hd) bf16
    v = v_ref[0]                                               # (H, tk, hd) bf16

    # Batched-over-heads scores, f32 accumulate.
    s = jnp.einsum('hqd,hkd->hqk', q, k,
                   preferred_element_type=jnp.float32)         # (H, tq, tk)
    s = s + mask_ref[0][None]                                  # additive key mask (1,1,tk)

    # Online softmax update.
    m_prev = m_sc[...]
    m_new = jnp.maximum(m_prev, s.max(axis=-1, keepdims=True))
    alpha = jnp.exp(m_prev - m_new)
    p = jnp.exp(s - m_new)
    l_sc[...] = alpha * l_sc[...] + p.sum(axis=-1, keepdims=True)
    acc_sc[...] = alpha * acc_sc[...] + jnp.einsum(
        'hqk,hkd->hqd', p.astype(v.dtype), v,
        preferred_element_type=jnp.float32)
    m_sc[...] = m_new

    @pl.when(kv == pl.num_programs(2) - 1)
    def _finalize():
        inv_l = pl.reciprocal(l_sc[...], approx=True)          # EUP reciprocal
        ctx = (acc_sc[...] * inv_l).astype(jnp.bfloat16)       # (H, tq, hd)

        # Per-head output projection summed over heads == concat(ctx_h) @ Wo.
        attn = jnp.einsum('hqd,hde->hqe', ctx, wo_ref[...],
                          preferred_element_type=jnp.float32).sum(axis=0)
        attn = attn + bo_ref[...]                              # (tq, D)

        x = x_ref[0].astype(jnp.float32)
        h1 = x + attn                                          # residual (dropout = id)

        h2 = _layer_norm(h1, ln2_w_ref[...], ln2_b_ref[...])
        f = jnp.dot(h2.astype(jnp.bfloat16), w1_ref[...],
                    preferred_element_type=jnp.float32) + b1_ref[...]
        f = jax.nn.gelu(f, approximate=False)                  # ACT2FN["gelu"] (erf)
        f2 = jnp.dot(f.astype(jnp.bfloat16), w2_ref[...],
                     preferred_element_type=jnp.float32) + b2_ref[...]

        # TODO(synk): cast_overflow_tensors only applies to fp16 activations; skipped here.
        out_ref[0] = (h1 + f2).astype(out_ref.dtype)


def whisper_encoder_layer(x, key_mask, params, *, num_heads,
                          seq_tile=128, q_tile=128, kv_tile=128):
    """x: (B, S, D); key_mask: additive per-key mask (B, S) (0 = keep, -1e9 = mask)."""
    # TODO(synk): general per-query (B,1,S,S) masks are not supported; Whisper encoder
    # padding masks are per-key only, which this covers.
    B, S, D = x.shape
    H = num_heads
    hd = D // H
    F = params["w1"].shape[1]

    ts = min(seq_tile, S)
    tq = min(q_tile, S)
    tk = min(kv_tile, S)
    assert S % ts == 0 and S % tq == 0 and S % tk == 0 and D == H * hd

    f32, bf16 = jnp.float32, jnp.bfloat16
    scale = hd ** -0.5
    # Fold query scale into Wq / bq; cast matmul weights to bf16 (f32 accumulate in-kernel).
    wq = (params["wq"].astype(f32) * scale).astype(bf16)
    bq = params["bq"].astype(f32) * scale
    wk = params["wk"].astype(bf16)
    wv = params["wv"].astype(bf16)
    bv = params["bv"].astype(f32)
    wo = params["wo"].astype(bf16).reshape(H, hd, D)           # head-major out-proj
    bo = params["bo"].astype(f32)
    # TODO(synk): for v7x/v5e VMEM budgets at whisper-large size, stream w1/w2 over an
    # extra F grid axis instead of keeping them fully resident.
    w1 = params["w1"].astype(bf16)
    b1 = params["b1"].astype(f32)
    w2 = params["w2"].astype(bf16)
    b2 = params["b2"].astype(f32)
    ln1_w = params["ln1_w"].astype(f32)
    ln1_b = params["ln1_b"].astype(f32)
    ln2_w = params["ln2_w"].astype(f32)
    ln2_b = params["ln2_b"].astype(f32)

    def rep(shape):
        return pl.BlockSpec(shape, lambda *args, n=len(shape): (0,) * n)

    # ------------------------- pass 1: LN1 + QKV -------------------------
    seq_spec = pl.BlockSpec((1, ts, D), lambda b, si: (b, si, 0))
    q, k, v = pl.pallas_call(
        qkv_kernel,
        out_shape=tuple(jax.ShapeDtypeStruct((B, S, D), bf16) for _ in range(3)),
        grid=(B, S // ts),
        in_specs=[
            seq_spec,                                          # x
            rep((1, D)), rep((1, D)),                          # ln1 w, b
            rep((D, D)), rep((1, D)),                          # wq, bq (scale folded)
            rep((D, D)),                                       # wk (no bias)
            rep((D, D)), rep((1, D)),                          # wv, bv
        ],
        out_specs=(seq_spec, seq_spec, seq_spec),
        compiler_params=pltpu.CompilerParams(
            dimension_semantics=("parallel", "parallel"),
            vmem_limit_bytes=48 * 1024 * 1024),
    )(x, ln1_w, ln1_b, wq, bq, wk, wv, bv)

    # Wrapper-side layout plumbing: (B,S,D) -> (B,H,S,hd) so the attention kernel
    # gets head-major, lane-dense tiles with no in-kernel transposes.
    def to_heads(t):
        return t.reshape(B, S, H, hd).transpose(0, 2, 1, 3)

    qh, kh, vh = to_heads(q), to_heads(k), to_heads(v)
    mask = key_mask.astype(f32).reshape(B, 1, S)

    # ---------------- pass 2: flash attention + residual + MLP ----------------
    out = pl.pallas_call(
        attn_ffn_kernel,
        out_shape=jax.ShapeDtypeStruct((B, S, D), x.dtype),
        grid=(B, S // tq, S // tk),
        in_specs=[
            pl.BlockSpec((1, tq, D), lambda b, qi, ki: (b, qi, 0)),        # x residual
            pl.BlockSpec((1, 1, tk), lambda b, qi, ki: (b, 0, ki)),        # key mask
            pl.BlockSpec((1, H, tq, hd), lambda b, qi, ki: (b, 0, qi, 0)),  # q
            pl.BlockSpec((1, H, tk, hd), lambda b, qi, ki: (b, 0, ki, 0)),  # k
            pl.BlockSpec((1, H, tk, hd), lambda b, qi, ki: (b, 0, ki, 0)),  # v
            rep((H, hd, D)), rep((1, D)),                                   # wo, bo
            rep((1, D)), rep((1, D)),                                       # ln2 w, b
            rep((D, F)), rep((1, F)),                                       # w1, b1
            rep((F, D)), rep((1, D)),                                       # w2, b2
        ],
        out_specs=pl.BlockSpec((1, tq, D), lambda b, qi, ki: (b, qi, 0)),
        scratch_shapes=[
            pltpu.VMEM((H, tq, 1), jnp.float32),   # running max
            pltpu.VMEM((H, tq, 1), jnp.float32),   # running denom
            pltpu.VMEM((H, tq, hd), jnp.float32),  # running numerator
        ],
        compiler_params=pltpu.CompilerParams(
            dimension_semantics=("parallel", "parallel", "arbitrary"),
            vmem_limit_bytes=48 * 1024 * 1024),
    )(x, mask, qh, kh, vh, wo, bo, ln2_w, ln2_b, w1, b1, w2, b2)
    return out


def reference_layer(x, key_mask, p, *, num_heads):
    """Pure-JAX f32 reference mirroring the PyTorch forward (eval mode)."""
    B, S, D = x.shape
    hd = D // num_heads
    x = x.astype(jnp.float32)

    def ln(v, w, b):
        mu = v.mean(-1, keepdims=True)
        var = jnp.square(v - mu).mean(-1, keepdims=True)
        return (v - mu) / jnp.sqrt(var + EPS) * w + b

    h = ln(x, p["ln1_w"], p["ln1_b"])
    q = (jnp.einsum("bsd,de->bse", h, p["wq"], precision=HI) + p["bq"]) * hd ** -0.5
    k = jnp.einsum("bsd,de->bse", h, p["wk"], precision=HI)
    v = jnp.einsum("bsd,de->bse", h, p["wv"], precision=HI) + p["bv"]
    q = q.reshape(B, S, num_heads, hd)
    k = k.reshape(B, S, num_heads, hd)
    v = v.reshape(B, S, num_heads, hd)
    scores = jnp.einsum("bqhd,bkhd->bhqk", q, k, precision=HI)
    scores = scores + key_mask[:, None, None, :]
    pr = jax.nn.softmax(scores, axis=-1)
    ctx = jnp.einsum("bhqk,bkhd->bqhd", pr, v, precision=HI).reshape(B, S, D)
    attn = jnp.einsum("bsd,de->bse", ctx, p["wo"], precision=HI) + p["bo"]
    h1 = x + attn

    h2 = ln(h1, p["ln2_w"], p["ln2_b"])
    f = jax.nn.gelu(jnp.einsum("bsd,df->bsf", h2, p["w1"], precision=HI) + p["b1"],
                    approximate=False)
    f2 = jnp.einsum("bsf,fd->bsd", f, p["w2"], precision=HI) + p["b2"]
    return h1 + f2


if __name__ == "__main__":
    # Small synthetic Whisper-like config (TPU-tile-friendly):
    # d_model=128, heads=4 (head_dim=32), ffn=512, seq=256, batch=2.
    B, S, D, H, F = 2, 256, 128, 4, 512

    key = jax.random.PRNGKey(0)
    keys = jax.random.split(key, 20)

    def w(k, shape, scale=0.05):
        return jax.random.normal(k, shape, jnp.float32) * scale

    params = {
        "ln1_w": 1.0 + 0.1 * jax.random.normal(keys[12], (1, D), jnp.float32),
        "ln1_b": 0.05 * jax.random.normal(keys[13], (1, D), jnp.float32),
        "wq": w(keys[0], (D, D)), "bq": w(keys[1], (1, D)),
        "wk": w(keys[2], (D, D)),                      # k_proj has no bias
        "wv": w(keys[3], (D, D)), "bv": w(keys[4], (1, D)),
        "wo": w(keys[5], (D, D)), "bo": w(keys[6], (1, D)),
        "ln2_w": 1.0 + 0.1 * jax.random.normal(keys[14], (1, D), jnp.float32),
        "ln2_b": 0.05 * jax.random.normal(keys[15], (1, D), jnp.float32),
        "w1": w(keys[7], (D, F)), "b1": w(keys[8], (1, F)),
        "w2": w(keys[9], (F, D)), "b2": w(keys[10], (1, D)),
    }

    x = jax.random.normal(keys[11], (B, S, D), jnp.float32)

    # Additive per-key mask: batch 0 attends everywhere, batch 1 masks the last 64 keys.
    key_valid = jnp.arange(S)[None, :] < jnp.array([S, S - 64])[:, None]   # (B, S)
    key_mask = jnp.where(key_valid, 0.0, -1e9).astype(jnp.float32)

    out = whisper_encoder_layer(x, key_mask, params, num_heads=H)
    out = jax.block_until_ready(out)

    ref = reference_layer(x, key_mask, params, num_heads=H)
    assert out.shape == (B, S, D)
    assert bool(jnp.all(jnp.isfinite(out)))
    np.testing.assert_allclose(np.asarray(out), np.asarray(ref), rtol=3e-2, atol=3e-2)

    print("KERNEL_OK")
</pallas_src>

<mosaic_0001>
module attributes {stable_mosaic.version = 11 : i64} {
  func.func @qkv_kernel(%arg0: i32, %arg1: i32, %arg2: memref<1x128x128xf32, #tpu.memory_space<vmem>>, %arg3: memref<1x128xf32, #tpu.memory_space<vmem>>, %arg4: memref<1x128xf32, #tpu.memory_space<vmem>>, %arg5: memref<128x128xbf16, #tpu.memory_space<vmem>>, %arg6: memref<1x128xf32, #tpu.memory_space<vmem>>, %arg7: memref<128x128xbf16, #tpu.memory_space<vmem>>, %arg8: memref<128x128xbf16, #tpu.memory_space<vmem>>, %arg9: memref<1x128xf32, #tpu.memory_space<vmem>>, %arg10: memref<1x128x128xbf16, #tpu.memory_space<vmem>>, %arg11: memref<1x128x128xbf16, #tpu.memory_space<vmem>>, %arg12: memref<1x128x128xbf16, #tpu.memory_space<vmem>>) attributes {dimension_semantics = [#tpu.dimension_semantics<parallel>, #tpu.dimension_semantics<parallel>], iteration_bounds = array<i64: 2, 2>, scalar_prefetch = 0 : i64, scratch_operands = 0 : i64, tpu.core_type = #tpu.core_type<tc>, window_params = [{transform_indices = @transform_0, window_bounds = array<i64: 1, 128, 128>}, {pipeline_mode = #tpu.pipeline_mode<synchronous>, transform_indices = @transform_1, window_bounds = array<i64: 1, 128>}, {pipeline_mode = #tpu.pipeline_mode<synchronous>, transform_indices = @transform_2, window_bounds = array<i64: 1, 128>}, {pipeline_mode = #tpu.pipeline_mode<synchronous>, transform_indices = @transform_3, window_bounds = array<i64: 128, 128>}, {pipeline_mode = #tpu.pipeline_mode<synchronous>, transform_indices = @transform_4, window_bounds = array<i64: 1, 128>}, {pipeline_mode = #tpu.pipeline_mode<synchronous>, transform_indices = @transform_5, window_bounds = array<i64: 128, 128>}, {pipeline_mode = #tpu.pipeline_mode<synchronous>, transform_indices = @transform_6, window_bounds = array<i64: 128, 128>}, {pipeline_mode = #tpu.pipeline_mode<synchronous>, transform_indices = @transform_7, window_bounds = array<i64: 1, 128>}, {transform_indices = @transform_8, window_bounds = array<i64: 1, 128, 128>}, {transform_indices = @transform_9, window_bounds = array<i64: 1, 128, 128>}, {transform_indices = @transform_10, window_bounds = array<i64: 1, 128, 128>}]} {
    %c0 = arith.constant 0 : index
    %c0_0 = arith.constant 0 : index
    %c0_1 = arith.constant 0 : index
    %0 = vector.load %arg2[%c0, %c0_0, %c0_1] : memref<1x128x128xf32, #tpu.memory_space<vmem>>, vector<1x128x128xf32>
    %1 = vector.shape_cast %0 : vector<1x128x128xf32> to vector<128x128xf32>
    %c0_2 = arith.constant 0 : index
    %c0_3 = arith.constant 0 : index
    %2 = vector.load %arg3[%c0_2, %c0_3] : memref<1x128xf32, #tpu.memory_space<vmem>>, vector<1x128xf32>
    %c0_4 = arith.constant 0 : index
    %c0_5 = arith.constant 0 : index
    %3 = vector.load %arg4[%c0_4, %c0_5] : memref<1x128xf32, #tpu.memory_space<vmem>>, vector<1x128xf32>
    %cst = arith.constant dense<0.000000e+00> : vector<128xf32>
    %4 = vector.multi_reduction <add>, %1, %cst [1] : vector<128x128xf32> to vector<128xf32>
    %5 = vector.shape_cast %4 : vector<128xf32> to vector<128x1xf32>
    %cst_6 = arith.constant 1.280000e+02 : f32
    %6 = vector.broadcast %cst_6 : f32 to vector<128x1xf32>
    %7 = arith.divf %5, %6 : vector<128x1xf32>
    %8 = vector.broadcast %7 : vector<128x1xf32> to vector<128x128xf32>
    %9 = arith.subf %1, %8 : vector<128x128xf32>
    %10 = arith.mulf %9, %9 : vector<128x128xf32>
    %cst_7 = arith.constant dense<0.000000e+00> : vector<128xf32>
    %11 = vector.multi_reduction <add>, %10, %cst_7 [1] : vector<128x128xf32> to vector<128xf32>
    %12 = vector.shape_cast %11 : vector<128xf32> to vector<128x1xf32>
    %cst_8 = arith.constant 1.280000e+02 : f32
    %13 = vector.broadcast %cst_8 : f32 to vector<128x1xf32>
    %14 = arith.divf %12, %13 : vector<128x1xf32>
    %15 = vector.broadcast %7 : vector<128x1xf32> to vector<128x128xf32>
    %16 = arith.subf %1, %15 : vector<128x128xf32>
    %cst_9 = arith.constant 9.99999974E-6 : f32
    %17 = vector.broadcast %cst_9 : f32 to vector<128x1xf32>
    %18 = arith.addf %14, %17 : vector<128x1xf32>
    %19 = math.rsqrt %18 : vector<128x1xf32>
    %20 = vector.broadcast %19 : vector<128x1xf32> to vector<128x128xf32>
    %21 = arith.mulf %16, %20 : vector<128x128xf32>
    %22 = vector.broadcast %2 : vector<1x128xf32> to vector<128x128xf32>
    %23 = arith.mulf %21, %22 : vector<128x128xf32>
    %24 = vector.broadcast %3 : vector<1x128xf32> to vector<128x128xf32>
    %25 = arith.addf %23, %24 : vector<128x128xf32>
    %26 = arith.truncf %25 : vector<128x128xf32> to vector<128x128xbf16>
    %c0_10 = arith.constant 0 : index
    %c0_11 = arith.constant 0 : index
    %27 = vector.load %arg5[%c0_10, %c0_11] : memref<128x128xbf16, #tpu.memory_space<vmem>>, vector<128x128xbf16>
    %cst_12 = arith.constant dense<0.000000e+00> : vector<128x128xf32>
    %28 = tpu.matmul %26, %27, %cst_12 {dimension_numbers = #tpu.dot_dimension_numbers<[1], [0], [0], [1], [0, 0, 1, 1], [], []>} : vector<128x128xbf16>, vector<128x128xbf16>, vector<128x128xf32> -> vector<128x128xf32>
    %c0_13 = arith.constant 0 : index
    %c0_14 = arith.constant 0 : index
    %29 = vector.load %arg6[%c0_13, %c0_14] : memref<1x128xf32, #tpu.memory_space<vmem>>, vector<1x128xf32>
    %30 = vector.broadcast %29 : vector<1x128xf32> to vector<128x128xf32>
    %31 = arith.addf %28, %30 : vector<128x128xf32>
    %c0_15 = arith.constant 0 : index
    %c0_16 = arith.constant 0 : index
    %32 = vector.load %arg7[%c0_15, %c0_16] : memref<128x128xbf16, #tpu.memory_space<vmem>>, vector<128x128xbf16>
    %cst_17 = arith.constant dense<0.000000e+00> : vector<128x128xf32>
    %33 = tpu.matmul %26, %32, %cst_17 {dimension_numbers = #tpu.dot_dimension_numbers<[1], [0], [0], [1], [0, 0, 1, 1], [], []>} : vector<128x128xbf16>, vector<128x128xbf16>, vector<128x128xf32> -> vector<128x128xf32>
    %c0_18 = arith.constant 0 : index
    %c0_19 = arith.constant 0 : index
    %34 = vector.load %arg8[%c0_18, %c0_19] : memref<128x128xbf16, #tpu.memory_space<vmem>>, vector<128x128xbf16>
    %cst_20 = arith.constant dense<0.000000e+00> : vector<128x128xf32>
    %35 = tpu.matmul %26, %34, %cst_20 {dimension_numbers = #tpu.dot_dimension_numbers<[1], [0], [0], [1], [0, 0, 1, 1], [], []>} : vector<128x128xbf16>, vector<128x128xbf16>, vector<128x128xf32> -> vector<128x128xf32>
    %c0_21 = arith.constant 0 : index
    %c0_22 = arith.constant 0 : index
    %36 = vector.load %arg9[%c0_21, %c0_22] : memref<1x128xf32, #tpu.memory_space<vmem>>, vector<1x128xf32>
    %37 = vector.broadcast %36 : vector<1x128xf32> to vector<128x128xf32>
    %38 = arith.addf %35, %37 : vector<128x128xf32>
    %39 = arith.truncf %31 : vector<128x128xf32> to vector<128x128xbf16>
    %c0_23 = arith.constant 0 : index
    %c0_24 = arith.constant 0 : index
    %c0_25 = arith.constant 0 : index
    %40 = vector.load %arg10[%c0_23, %c0_24, %c0_25] : memref<1x128x128xbf16, #tpu.memory_space<vmem>>, vector<1x128x128xbf16>
    %41 = vector.shape_cast %40 : vector<1x128x128xbf16> to vector<128x128xbf16>
    %42 = vector.shape_cast %39 : vector<128x128xbf16> to vector<1x128x128xbf16>
    tpu.vector_store %arg10[%c0_23, %c0_24, %c0_25], %42 {strides = array<i32>} : memref<1x128x128xbf16, #tpu.memory_space<vmem>>, vector<1x128x128xbf16>,
    %43 = arith.truncf %33 : vector<128x128xf32> to vector<128x128xbf16>
    %c0_26 = arith.constant 0 : index
    %c0_27 = arith.constant 0 : index
    %c0_28 = arith.constant 0 : index
    %44 = vector.load %arg11[%c0_26, %c0_27, %c0_28] : memref<1x128x128xbf16, #tpu.memory_space<vmem>>, vector<1x128x128xbf16>
    %45 = vector.shape_cast %44 : vector<1x128x128xbf16> to vector<128x128xbf16>
    %46 = vector.shape_cast %43 : vector<128x128xbf16> to vector<1x128x128xbf16>
    tpu.vector_store %arg11[%c0_26, %c0_27, %c0_28], %46 {strides = array<i32>} : memref<1x128x128xbf16, #tpu.memory_space<vmem>>, vector<1x128x128xbf16>,
    %47 = arith.truncf %38 : vector<128x128xf32> to vector<128x128xbf16>
    %c0_29 = arith.constant 0 : index
    %c0_30 = arith.constant 0 : index
    %c0_31 = arith.constant 0 : index
    %48 = vector.load %arg12[%c0_29, %c0_30, %c0_31] : memref<1x128x128xbf16, #tpu.memory_space<vmem>>, vector<1x128x128xbf16>
    %49 = vector.shape_cast %48 : vector<1x128x128xbf16> to vector<128x128xbf16>
    %50 = vector.shape_cast %47 : vector<128x128xbf16> to vector<1x128x128xbf16>
    tpu.vector_store %arg12[%c0_29, %c0_30, %c0_31], %50 {strides = array<i32>} : memref<1x128x128xbf16, #tpu.memory_space<vmem>>, vector<1x128x128xbf16>,
    return
  }
  func.func @transform_0(%arg0: i32, %arg1: i32) -> (i32, i32, i32) {
    %c0_i32 = arith.constant 0 : i32
    %c0_i32_0 = arith.constant 0 : i32
    return %arg0, %arg1, %c0_i32 : i32, i32, i32
  }
  func.func @transform_1(%arg0: i32, %arg1: i32) -> (i32, i32) {
    %c0_i32 = arith.constant 0 : i32
    %c0_i32_0 = arith.constant 0 : i32
    %c0_i32_1 = arith.constant 0 : i32
    return %c0_i32, %c0_i32_0 : i32, i32
  }
  func.func @transform_2(%arg0: i32, %arg1: i32) -> (i32, i32) {
    %c0_i32 = arith.constant 0 : i32
    %c0_i32_0 = arith.constant 0 : i32
    %c0_i32_1 = arith.constant 0 : i32
    return %c0_i32, %c0_i32_0 : i32, i32
  }
  func.func @transform_3(%arg0: i32, %arg1: i32) -> (i32, i32) {
    %c0_i32 = arith.constant 0 : i32
    %c0_i32_0 = arith.constant 0 : i32
    %c0_i32_1 = arith.constant 0 : i32
    return %c0_i32, %c0_i32_0 : i32, i32
  }
  func.func @transform_4(%arg0: i32, %arg1: i32) -> (i32, i32) {
    %c0_i32 = arith.constant 0 : i32
    %c0_i32_0 = arith.constant 0 : i32
    %c0_i32_1 = arith.constant 0 : i32
    return %c0_i32, %c0_i32_0 : i32, i32
  }
  func.func @transform_5(%arg0: i32, %arg1: i32) -> (i32, i32) {
    %c0_i32 = arith.constant 0 : i32
    %c0_i32_0 = arith.constant 0 : i32
    %c0_i32_1 = arith.constant 0 : i32
    return %c0_i32, %c0_i32_0 : i32, i32
  }
  func.func @transform_6(%arg0: i32, %arg1: i32) -> (i32, i32) {
    %c0_i32 = arith.constant 0 : i32
    %c0_i32_0 = arith.constant 0 : i32
    %c0_i32_1 = arith.constant 0 : i32
    return %c0_i32, %c0_i32_0 : i32, i32
  }
  func.func @transform_7(%arg0: i32, %arg1: i32) -> (i32, i32) {
    %c0_i32 = arith.constant 0 : i32
    %c0_i32_0 = arith.constant 0 : i32
    %c0_i32_1 = arith.constant 0 : i32
    return %c0_i32, %c0_i32_0 : i32, i32
  }
  func.func @transform_8(%arg0: i32, %arg1: i32) -> (i32, i32, i32) {
    %c0_i32 = arith.constant 0 : i32
    %c0_i32_0 = arith.constant 0 : i32
    return %arg0, %arg1, %c0_i32 : i32, i32, i32
  }
  func.func @transform_9(%arg0: i32, %arg1: i32) -> (i32, i32, i32) {
    %c0_i32 = arith.constant 0 : i32
    %c0_i32_0 = arith.constant 0 : i32
    return %arg0, %arg1, %c0_i32 : i32, i32, i32
  }
  func.func @transform_10(%arg0: i32, %arg1: i32) -> (i32, i32, i32) {
    %c0_i32 = arith.constant 0 : i32
    %c0_i32_0 = arith.constant 0 : i32
    return %arg0, %arg1, %c0_i32 : i32, i32, i32
  }
}

</mosaic_0001>

<llo_original>
// kernel: tpu_custom_call.1
$region0: #{tpu_custom_call.1}
  #allocation0 [shape = 'u32[]', space=smem, size = 0x4, offset = 0x4, fixed_abs, tag = 'smem constant byte address 0x4 - core index']
  #allocation1 [shape = 'u32[144,128]{1,0:T(1,128)}', space=vmem, size = 0x12000, scoped, tag = 'internal scratch']
  %s0 = inlined_call_operand.hbm [shape: f32[2,256,128], index: 0, kind: input, shape index: {}]
  %s1 = inlined_call_operand.vmem [shape: f32[1,128], index: 1, kind: input, shape index: {}]
  %s2 = inlined_call_operand.vmem [shape: f32[1,128], index: 2, kind: input, shape index: {}]
  %s3 = inlined_call_operand.hbm [shape: bf16[128,128], index: 3, kind: input, shape index: {}]
  %s4 = inlined_call_operand.vmem [shape: f32[1,128], index: 4, kind: input, shape index: {}]
  %s5 = inlined_call_operand.hbm [shape: bf16[128,128], index: 5, kind: input, shape index: {}]
  %s6 = inlined_call_operand.hbm [shape: bf16[128,128], index: 6, kind: input, shape index: {}]
  %s7 = inlined_call_operand.vmem [shape: f32[1,128], index: 7, kind: input, shape index: {}]
  %s8 = inlined_call_operand.hbm [shape: bf16[2,256,128], index: 8, kind: output, shape index: {0}]
  %s9 = inlined_call_operand.hbm [shape: bf16[2,256,128], index: 9, kind: output, shape index: {1}]
  %s10 = inlined_call_operand.hbm [shape: bf16[2,256,128], index: 10, kind: output, shape index: {2}]
  %11 = xla_tuple %s8, %s9, %s10
  %s12 = sld [smem:[#allocation0]]
  $region97: #{tpu_custom_call.1} parent=0
    _
  %s14 = ssub.s32 1, %s12
  %s15 = scalar_select 0, %s14, %s12
  $region1: #{tpu_custom_call.1} parent=0
    #allocation2 [shape = 'u8[131072]{0}', space=vmem, size = 0x20000, scoped, tag = 'input window, operand 0']
    #allocation3 [shape = 's32[2]{0}', space=sflag, size = 0x8, scoped, tag = 'scoped memory for tpu_custom_call.1']
    #allocation4 [shape = 's32[2]{0}', space=sflag, size = 0x8, scoped, tag = 'scoped memory for tpu_custom_call.1']
    #allocation5 [shape = 'u8[32768]{0}', space=vmem, size = 0x8000, scoped, tag = 'input window, operand 3, single buffered']
    #allocation6 [shape = 's32[1]{0}', space=sflag, size = 0x4, scoped, tag = 'scoped memory for tpu_custom_call.1']
    #allocation7 [shape = 'u8[32768]{0}', space=vmem, size = 0x8000, scoped, tag = 'input window, operand 5, single buffered']
    #allocation8 [shape = 'u8[32768]{0}', space=vmem, size = 0x8000, scoped, tag = 'input window, operand 6, single buffered']
    #allocation9 [shape = 's32[1]{0}', space=sflag, size = 0x4, scoped, tag = 'scoped memory for tpu_custom_call.1']
    #allocation10 [shape = 'u8[65536]{0}', space=vmem, size = 0x10000, scoped, tag = 'output window, operand 0']
    #allocation11 [shape = 'u8[65536]{0}', space=vmem, size = 0x10000, scoped, tag = 'output window, operand 1']
    #allocation12 [shape = 's32[2]{0}', space=sflag, size = 0x8, scoped, tag = 'scoped memory for tpu_custom_call.1']
    #allocation13 [shape = 'u8[65536]{0}', space=vmem, size = 0x10000, scoped, tag = 'output window, operand 2']
    %16 = vsyncpa [#allocation3], 0
    %s17 = scalar_lea.sflag [#allocation3], 1
    %18 = vsyncpa %s17, 0
    %19 = vsyncpa [#allocation6], 0
    %20 = vsyncpa [#allocation9], 0
    %21 = vsyncpa [#allocation4], 0
    %s22 = scalar_lea.sflag [#allocation4], 1
    %23 = vsyncpa %s22, 0
    %24 = vsyncpa [#allocation12], 0
    %s25 = scalar_lea.sflag [#allocation12], 1
    %26 = vsyncpa %s25, 0
    loop: start=0, step=1, limit=6
    $region2: #{tpu_custom_call.1} parent=1 // loop_pre_header
      _
    $region3: #{tpu_custom_call.1} parent=1 // loop_header
      %s28 = sphi 0, %s32
      %p29 = scmp.ge.s32.totalorder %s28, 6
      %s35 = sphi 0, %s47
      %s36 = sphi 0, %s43
      %s37 = sphi 0, %s35
      %s38 = sphi 0, %s36
      %s39 = sphi 0, %s37
      %s40 = sphi 0, %s38
      %s52 = sphi 0, %s54
      %s55 = sphi 0, %s52
      %s56 = sphi 0, %s55
      %s72 = sphi 0, %s56
      %s76 = sphi 0, %s76
      %s78 = sphi 0, %s76
      %s79 = sphi 0, %s78
      %s93 = sphi 0, %s79
      %s97 = sphi 0, %s97
      %s99 = sphi 0, %s97
      %s100 = sphi 0, %s99
      %s114 = sphi 0, %s100
      %s118 = sphi 0, %s118
      %s120 = sphi 0, %s118
      %s121 = sphi 0, %s120
      %s135 = sphi 0, %s121
      %s139 = sphi 0, %s139
      %s141 = sphi 0, %s139
      %s142 = sphi 0, %s141
      %s156 = sphi 0, %s142
      %s160 = sphi 0, %s160
      %s162 = sphi 0, %s160
      %s163 = sphi 0, %s162
      %s177 = sphi 0, %s163
      %s181 = sphi 0, %s181
      %s183 = sphi 0, %s181
      %s184 = sphi 0, %s183
      %s198 = sphi 0, %s184
      %s202 = sphi 0, %s202
      %s204 = sphi 0, %s202
      %s205 = sphi 0, %s204
      %s219 = sphi 0, %s205
      %s227 = sphi 0, %s229
      %s230 = sphi 0, %s227
      %s231 = sphi 0, %s230
      %s247 = sphi 0, %s231
      %s255 = sphi 0, %s257
      %s258 = sphi 0, %s255
      %s259 = sphi 0, %s258
      %s275 = sphi 0, %s259
      %s283 = sphi 0, %s285
      %s286 = sphi 0, %s283
      %s287 = sphi 0, %s286
      %s303 = sphi 0, %s287
    $region4: #{tpu_custom_call.1} parent=1 // loop_header_branch
      %31 = sbr.rel (%p29) target = $region8
    $region5: #{tpu_custom_call.1} parent=1 // loop_body
      %s33 = ssub.s32 %s28, 1
      %s34 = ssub.s32 %s28, 2
      %s41 = sadd.s32 1, %s36
      %p42 = scmp.ge.s32.totalorder %s41, 2
      %s43 = scalar_select %p42, 0, %s41
      %s44 = sadd.s32 1, %s35
      %s45 = scalar_select %p42, %s44, %s35
      %p46 = scmp.ge.s32.totalorder %s45, 2
      %s47 = scalar_select %p46, 0, %s45
      %s48 = ssub.s32 %s35, %s47
      %s49 = ssub.s32 %s36, %s43
      %s50 = sor.u32 %s48, %s49
      %p51 = scmp.eq.s32.totalorder %s50, 0
      %s53 = sadd.s32 %s52, 1
      %s54 = scalar_select %p51, %s52, %s53
      %p57 = pneg %p51
      %p58 = scmp.eq.s32.totalorder %s28, 3
      %p59 = por %p57, %p58
      %p60 = scmp.ne.s32.totalorder %s52, %s55
      %p61 = scmp.eq.s32.totalorder %s28, 0
      %p62 = por %p60, %p61
      %p63 = scmp.ne.s32.totalorder %s52, %s55
      %p64 = scmp.eq.s32.totalorder %s33, 3
      %p65 = por %p63, %p64
      %p66 = scmp.ne.s32.totalorder %s55, %s56
      %p67 = scmp.eq.s32.totalorder %s33, 0
      %p68 = por %p66, %p67
      %p69 = scmp.ne.s32.totalorder %s55, %s56
      %p70 = scmp.eq.s32.totalorder %s34, 3
      %p71 = por %p69, %p70
      %p73 = scmp.ne.s32.totalorder %s56, %s72
      %p74 = scmp.eq.s32.totalorder %s34, 0
      %p75 = por %p73, %p74
      %s77 = sadd.s32 %s76, 1
      %p80 = scmp.eq.s32.totalorder %s28, 3
      %p81 = scmp.ne.s32.totalorder %s76, %s78
      %p82 = scmp.eq.s32.totalorder %s28, 0
      %p83 = por %p81, %p82
      %p84 = scmp.ne.s32.totalorder %s76, %s78
      %p85 = scmp.eq.s32.totalorder %s33, 3
      %p86 = por %p84, %p85
      %p87 = scmp.ne.s32.totalorder %s78, %s79
      %p88 = scmp.eq.s32.totalorder %s33, 0
      %p89 = por %p87, %p88
      %p90 = scmp.ne.s32.totalorder %s78, %s79
      %p91 = scmp.eq.s32.totalorder %s34, 3
      %p92 = por %p90, %p91
      %p94 = scmp.ne.s32.totalorder %s79, %s93
      %p95 = scmp.eq.s32.totalorder %s34, 0
      %p96 = por %p94, %p95
      %s98 = sadd.s32 %s97, 1
      %p101 = scmp.eq.s32.totalorder %s28, 3
      %p102 = scmp.ne.s32.totalorder %s97, %s99
      %p103 = scmp.eq.s32.totalorder %s28, 0
      %p104 = por %p102, %p103
      %p105 = scmp.ne.s32.totalorder %s97, %s99
      %p106 = scmp.eq.s32.totalorder %s33, 3
      %p107 = por %p105, %p106
      %p108 = scmp.ne.s32.totalorder %s99, %s100
      %p109 = scmp.eq.s32.totalorder %s33, 0
      %p110 = por %p108, %p109
      %p111 = scmp.ne.s32.totalorder %s99, %s100
      %p112 = scmp.eq.s32.totalorder %s34, 3
      %p113 = por %p111, %p112
      %p115 = scmp.ne.s32.totalorder %s100, %s114
      %p116 = scmp.eq.s32.totalorder %s34, 0
      %p117 = por %p115, %p116
      %s119 = sadd.s32 %s118, 1
      %p122 = scmp.eq.s32.totalorder %s28, 3
      %p123 = scmp.ne.s32.totalorder %s118, %s120
      %p124 = scmp.eq.s32.totalorder %s28, 0
      %p125 = por %p123, %p124
      %p126 = scmp.ne.s32.totalorder %s118, %s120
      %p127 = scmp.eq.s32.totalorder %s33, 3
      %p128 = por %p126, %p127
      %p129 = scmp.ne.s32.totalorder %s120, %s121
      %p130 = scmp.eq.s32.totalorder %s33, 0
      %p131 = por %p129, %p130
      %p132 = scmp.ne.s32.totalorder %s120, %s121
      %p133 = scmp.eq.s32.totalorder %s34, 3
      %p134 = por %p132, %p133
      %p136 = scmp.ne.s32.totalorder %s121, %s135
      %p137 = scmp.eq.s32.totalorder %s34, 0
      %p138 = por %p136, %p137
      %s140 = sadd.s32 %s139, 1
      %p143 = scmp.eq.s32.totalorder %s28, 3
      %p144 = scmp.ne.s32.totalorder %s139, %s141
      %p145 = scmp.eq.s32.totalorder %s28, 0
      %p146 = por %p144, %p145
      %p147 = scmp.ne.s32.totalorder %s139, %s141
      %p148 = scmp.eq.s32.totalorder %s33, 3
      %p149 = por %p147, %p148
      %p150 = scmp.ne.s32.totalorder %s141, %s142
      %p151 = scmp.eq.s32.totalorder %s33, 0
      %p152 = por %p150, %p151
      %p153 = scmp.ne.s32.totalorder %s141, %s142
      %p154 = scmp.eq.s32.totalorder %s34, 3
      %p155 = por %p153, %p154
      %p157 = scmp.ne.s32.totalorder %s142, %s156
      %p158 = scmp.eq.s32.totalorder %s34, 0
      %p159 = por %p157, %p158
      %s161 = sadd.s32 %s160, 1
      %p164 = scmp.eq.s32.totalorder %s28, 3
      %p165 = scmp.ne.s32.totalorder %s160, %s162
      %p166 = scmp.eq.s32.totalorder %s28, 0
      %p167 = por %p165, %p166
      %p168 = scmp.ne.s32.totalorder %s160, %s162
      %p169 = scmp.eq.s32.totalorder %s33, 3
      %p170 = por %p168, %p169
      %p171 = scmp.ne.s32.totalorder %s162, %s163
      %p172 = scmp.eq.s32.totalorder %s33, 0
      %p173 = por %p171, %p172
      %p174 = scmp.ne.s32.totalorder %s162, %s163
      %p175 = scmp.eq.s32.totalorder %s34, 3
      %p176 = por %p174, %p175
      %p178 = scmp.ne.s32.totalorder %s163, %s177
      %p179 = scmp.eq.s32.totalorder %s34, 0
      %p180 = por %p178, %p179
      %s182 = sadd.s32 %s181, 1
      %p185 = scmp.eq.s32.totalorder %s28, 3
      %p186 = scmp.ne.s32.totalorder %s181, %s183
      %p187 = scmp.eq.s32.totalorder %s28, 0
      %p188 = por %p186, %p187
      %p189 = scmp.ne.s32.totalorder %s181, %s183
      %p190 = scmp.eq.s32.totalorder %s33, 3
      %p191 = por %p189, %p190
      %p192 = scmp.ne.s32.totalorder %s183, %s184
      %p193 = scmp.eq.s32.totalorder %s33, 0
      %p194 = por %p192, %p193
      %p195 = scmp.ne.s32.totalorder %s183, %s184
      %p196 = scmp.eq.s32.totalorder %s34, 3
      %p197 = por %p195, %p196
      %p199 = scmp.ne.s32.totalorder %s184, %s198
      %p200 = scmp.eq.s32.totalorder %s34, 0
      %p201 = por %p199, %p200
      %s203 = sadd.s32 %s202, 1
      %p206 = scmp.eq.s32.totalorder %s28, 3
      %p207 = scmp.ne.s32.totalorder %s202, %s204
      %p208 = scmp.eq.s32.totalorder %s28, 0
      %p209 = por %p207, %p208
      %p210 = scmp.ne.s32.totalorder %s202, %s204
      %p211 = scmp.eq.s32.totalorder %s33, 3
      %p212 = por %p210, %p211
      %p213 = scmp.ne.s32.totalorder %s204, %s205
      %p214 = scmp.eq.s32.totalorder %s33, 0
      %p215 = por %p213, %p214
      %p216 = scmp.ne.s32.totalorder %s204, %s205
      %p217 = scmp.eq.s32.totalorder %s34, 3
      %p218 = por %p216, %p217
      %p220 = scmp.ne.s32.totalorder %s205, %s219
      %p221 = scmp.eq.s32.totalorder %s34, 0
      %p222 = por %p220, %p221
      %s223 = ssub.s32 %s35, %s47
      %s224 = ssub.s32 %s36, %s43
      %s225 = sor.u32 %s223, %s224
      %p226 = scmp.eq.s32.totalorder %s225, 0
      %s228 = sadd.s32 %s227, 1
      %s229 = scalar_select %p226, %s227, %s228
      %p232 = pneg %p226
      %p233 = scmp.eq.s32.totalorder %s28, 3
      %p234 = por %p232, %p233
      %p235 = scmp.ne.s32.totalorder %s227, %s230
      %p236 = scmp.eq.s32.totalorder %s28, 0
      %p237 = por %p235, %p236
      %p238 = scmp.ne.s32.totalorder %s227, %s230
      %p239 = scmp.eq.s32.totalorder %s33, 3
      %p240 = por %p238, %p239
      %p241 = scmp.ne.s32.totalorder %s230, %s231
      %p242 = scmp.eq.s32.totalorder %s33, 0
      %p243 = por %p241, %p242
      %p244 = scmp.ne.s32.totalorder %s230, %s231
      %p245 = scmp.eq.s32.totalorder %s34, 3
      %p246 = por %p244, %p245
      %p248 = scmp.ne.s32.totalorder %s231, %s247
      %p249 = scmp.eq.s32.totalorder %s34, 0
      %p250 = por %p248, %p249
      %s251 = ssub.s32 %s35, %s47
      %s252 = ssub.s32 %s36, %s43
      %s253 = sor.u32 %s251, %s252
      %p254 = scmp.eq.s32.totalorder %s253, 0
      %s256 = sadd.s32 %s255, 1
      %s257 = scalar_select %p254, %s255, %s256
      %p260 = pneg %p254
      %p261 = scmp.eq.s32.totalorder %s28, 3
      %p262 = por %p260, %p261
      %p263 = scmp.ne.s32.totalorder %s255, %s258
      %p264 = scmp.eq.s32.totalorder %s28, 0
      %p265 = por %p263, %p264
      %p266 = scmp.ne.s32.totalorder %s255, %s258
      %p267 = scmp.eq.s32.totalorder %s33, 3
      %p268 = por %p266, %p267
      %p269 = scmp.ne.s32.totalorder %s258, %s259
      %p270 = scmp.eq.s32.totalorder %s33, 0
      %p271 = por %p269, %p270
      %p272 = scmp.ne.s32.totalorder %s258, %s259
      %p273 = scmp.eq.s32.totalorder %s34, 3
      %p274 = por %p272, %p273
      %p276 = scmp.ne.s32.totalorder %s259, %s275
      %p277 = scmp.eq.s32.totalorder %s34, 0
      %p278 = por %p276, %p277
      %s279 = ssub.s32 %s35, %s47
      %s280 = ssub.s32 %s36, %s43
      %s281 = sor.u32 %s279, %s280
      %p282 = scmp.eq.s32.totalorder %s281, 0
      %s284 = sadd.s32 %s283, 1
      %s285 = scalar_select %p282, %s283, %s284
      %p288 = pneg %p282
      %p289 = scmp.eq.s32.totalorder %s28, 3
      %p290 = por %p288, %p289
      %p291 = scmp.ne.s32.totalorder %s283, %s286
      %p292 = scmp.eq.s32.totalorder %s28, 0
      %p293 = por %p291, %p292
      %p294 = scmp.ne.s32.totalorder %s283, %s286
      %p295 = scmp.eq.s32.totalorder %s33, 3
      %p296 = por %p294, %p295
      %p297 = scmp.ne.s32.totalorder %s286, %s287
      %p298 = scmp.eq.s32.totalorder %s33, 0
      %p299 = por %p297, %p298
      %p300 = scmp.ne.s32.totalorder %s286, %s287
      %p301 = scmp.eq.s32.totalorder %s34, 3
      %p302 = por %p300, %p301
      %p304 = scmp.ne.s32.totalorder %s287, %s303
      %p305 = scmp.eq.s32.totalorder %s34, 0
      %p306 = por %p304, %p305
      %p307 = scmp.le.s32.totalorder 1, %s28
      %p308 = scmp.lt.s32.totalorder %s28, 5
      %p309 = pnand %p307, %p308
      %p310 = pneg %p309
      // Predicated region
      $region9: #{tpu_custom_call.1} parent=5 // pred_check
        _
      $region10: #{tpu_custom_call.1} parent=5 // pred_check_branch
        %312 = sbr.rel (%p309) target = $region12
      $region11: #{tpu_custom_call.1} parent=5 // pred_region
        %s313 = ssub.s32 %s28, 1
        // Predicated region
        $region13: #{tpu_custom_call.1} parent=11 // pred_check
          %p314 = pneg %p89
        $region14: #{tpu_custom_call.1} parent=11 // pred_check_branch
          %316 = sbr.rel (%p314) target = $region16
        $region15: #{tpu_custom_call.1} parent=11 // pred_region
          _
        $region16: #{tpu_custom_call.1} parent=11 // pred_fallthru
          _
        // Predicated region
        $region17: #{tpu_custom_call.1} parent=11 // pred_check
          %p317 = pneg %p110
        $region18: #{tpu_custom_call.1} parent=11 // pred_check_branch
          %319 = sbr.rel (%p317) target = $region20
        $region19: #{tpu_custom_call.1} parent=11 // pred_region
          _
        $region20: #{tpu_custom_call.1} parent=11 // pred_fallthru
          _
        // Predicated region
        $region21: #{tpu_custom_call.1} parent=11 // pred_check
          %p320 = pneg %p131
        $region22: #{tpu_custom_call.1} parent=11 // pred_check_branch
          %322 = sbr.rel (%p320) target = $region24
        $region23: #{tpu_custom_call.1} parent=11 // pred_region
          %s324 = ssub.s32 1024, 1024
          %325 = vsyncadd [#allocation6], %s324
          %s326 = sshll.u32 [#allocation5], 4
          %s327 = int_to_ptr.vmem [resolvable:$true] %s326
          %332 = dma.hbm_to_vmem [thread:$0]  %s3, 1024, %s327, [#allocation6], 64, 64, 4
        $region24: #{tpu_custom_call.1} parent=11 // pred_fallthru
          _
        // Predicated region
        $region25: #{tpu_custom_call.1} parent=11 // pred_check
          %p333 = pneg %p152
        $region26: #{tpu_custom_call.1} parent=11 // pred_check_branch
          %335 = sbr.rel (%p333) target = $region28
        $region27: #{tpu_custom_call.1} parent=11 // pred_region
          _
        $region28: #{tpu_custom_call.1} parent=11 // pred_fallthru
          _
        // Predicated region
        $region29: #{tpu_custom_call.1} parent=11 // pred_check
          %p336 = pneg %p173
        $region30: #{tpu_custom_call.1} parent=11 // pred_check_branch
          %338 = sbr.rel (%p336) target = $region32
        $region31: #{tpu_custom_call.1} parent=11 // pred_region
          %s340 = ssub.s32 1024, 1024
          %341 = vsyncadd [#allocation6], %s340
          %s342 = sshll.u32 [#allocation7], 4
          %s343 = int_to_ptr.vmem [resolvable:$true] %s342
          %348 = dma.hbm_to_vmem [thread:$0]  %s5, 1024, %s343, [#allocation6], 64, 64, 4
        $region32: #{tpu_custom_call.1} parent=11 // pred_fallthru
          _
        // Predicated region
        $region33: #{tpu_custom_call.1} parent=11 // pred_check
          %p349 = pneg %p194
        $region34: #{tpu_custom_call.1} parent=11 // pred_check_branch
          %351 = sbr.rel (%p349) target = $region36
        $region35: #{tpu_custom_call.1} parent=11 // pred_region
          %s353 = ssub.s32 1024, 1024
          %354 = vsyncadd [#allocation9], %s353
          %s355 = sshll.u32 [#allocation8], 4
          %s356 = int_to_ptr.vmem [resolvable:$true] %s355
          %361 = dma.hbm_to_vmem [thread:$0]  %s6, 1024, %s356, [#allocation9], 64, 64, 4
        $region36: #{tpu_custom_call.1} parent=11 // pred_fallthru
          _
        // Predicated region
        $region37: #{tpu_custom_call.1} parent=11 // pred_check
          %p362 = pneg %p215
        $region38: #{tpu_custom_call.1} parent=11 // pred_check_branch
          %364 = sbr.rel (%p362) target = $region40
        $region39: #{tpu_custom_call.1} parent=11 // pred_region
          _
        $region40: #{tpu_custom_call.1} parent=11 // pred_fallthru
          _
      $region12: #{tpu_custom_call.1} parent=5 // pred_fallthru
        _
      %p365 = scmp.lt.s32.totalorder %s28, 4
      // Predicated region
      $region41: #{tpu_custom_call.1} parent=5 // pred_check
        %p366 = pneg %p365
      $region42: #{tpu_custom_call.1} parent=5 // pred_check_branch
        %368 = sbr.rel (%p366) target = $region44
      $region43: #{tpu_custom_call.1} parent=5 // pred_region
        // Predicated region
        $region45: #{tpu_custom_call.1} parent=43 // pred_check
          %p369 = pneg %p62
        $region46: #{tpu_custom_call.1} parent=43 // pred_check_branch
          %371 = sbr.rel (%p369) target = $region48
        $region47: #{tpu_custom_call.1} parent=43 // pred_region
          %s372 = sand.u32 %s52, 1
          %s373 = scalar_lea.sflag [#allocation3], %s372
          %s374 = sand.u32 %s52, 1
          %s375 = smul.addr %s374, 128
          %s376 = scalar_lea.vmem [#allocation2], %s375
          %s377 = smul.u32 16, %s36
          %s379 = ssub.s32 2048, 2048
          %380 = vsyncadd %s373, %s379
          %s381 = smul.addr %s35, 32
          %s382 = sadd.s32 %s377, %s381
          %s383 = smul.addr %s382, 128
          %s384 = scalar_lea.hbm %s0, %s383
          %s385 = sshll.u32 %s376, 4
          %s386 = int_to_ptr.vmem [resolvable:$true] %s385
          %391 = dma.hbm_to_vmem [thread:$0]  %s384, 2048, %s386, %s373, 128, 128, 8
        $region48: #{tpu_custom_call.1} parent=43 // pred_fallthru
          _
      $region44: #{tpu_custom_call.1} parent=5 // pred_fallthru
        _
      %p392 = scmp.le.s32.totalorder 1, %s28
      %p393 = scmp.lt.s32.totalorder %s28, 5
      %p394 = pnand %p392, %p393
      %p395 = pneg %p394
      // Predicated region
      $region49: #{tpu_custom_call.1} parent=5 // pred_check
        _
      $region50: #{tpu_custom_call.1} parent=5 // pred_check_branch
        %397 = sbr.rel (%p394) target = $region52
      $region51: #{tpu_custom_call.1} parent=5 // pred_region
        %s398 = ssub.s32 %s28, 1
        %s399 = sand.u32 %s55, 1
        %s400 = scalar_lea.sflag [#allocation3], %s399
        %s401 = sand.u32 %s55, 1
        %s402 = smul.addr %s401, 128
        %s403 = scalar_lea.vmem [#allocation2], %s402
        // Predicated region
        $region53: #{tpu_custom_call.1} parent=51 // pred_check
          %p404 = pneg %p68
        $region54: #{tpu_custom_call.1} parent=51 // pred_check_branch
          %406 = sbr.rel (%p404) target = $region56
        $region55: #{tpu_custom_call.1} parent=51 // pred_region
          %407 = dma.done %s400, 2048
        $region56: #{tpu_custom_call.1} parent=51 // pred_fallthru
          _
        // Predicated region
        $region57: #{tpu_custom_call.1} parent=51 // pred_check
          %p408 = pneg %p131
        $region58: #{tpu_custom_call.1} parent=51 // pred_check_branch
          %410 = sbr.rel (%p408) target = $region60
        $region59: #{tpu_custom_call.1} parent=51 // pred_region
          %411 = dma.done [#allocation6], 1024
        $region60: #{tpu_custom_call.1} parent=51 // pred_fallthru
          _
        // Predicated region
        $region61: #{tpu_custom_call.1} parent=51 // pred_check
          %p412 = pneg %p173
        $region62: #{tpu_custom_call.1} parent=51 // pred_check_branch
          %414 = sbr.rel (%p412) target = $region64
        $region63: #{tpu_custom_call.1} parent=51 // pred_region
          %415 = dma.done [#allocation6], 1024
        $region64: #{tpu_custom_call.1} parent=51 // pred_fallthru
          _
        // Predicated region
        $region65: #{tpu_custom_call.1} parent=51 // pred_check
          %p416 = pneg %p194
        $region66: #{tpu_custom_call.1} parent=51 // pred_check_branch
          %418 = sbr.rel (%p416) target = $region68
        $region67: #{tpu_custom_call.1} parent=51 // pred_region
          %419 = dma.done [#allocation9], 1024
        $region68: #{tpu_custom_call.1} parent=51 // pred_fallthru
          _
        %s420 = sand.u32 %s55, 1
        %s421 = scalar_lea.sflag [#allocation3], %s420
        %s422 = sand.u32 %s55, 1
        %s423 = smul.addr %s422, 128
        %s424 = scalar_lea.vmem [#allocation2], %s423
        %p425 = pneg %p68
        %p426 = pneg %p65
        %p427 = pneg %p89
        %p428 = pneg %p86
        %p429 = pneg %p110
        %p430 = pneg %p107
        %p431 = pneg %p131
        %p432 = pneg %p128
        %p433 = pneg %p152
        %p434 = pneg %p149
        %p435 = pneg %p173
        %p436 = pneg %p170
        %p437 = pneg %p194
        %p438 = pneg %p191
        %p439 = pneg %p215
        %p440 = pneg %p212
        %p441 = pneg %p243
        %p442 = pneg %p240
        %s443 = sand.u32 %s230, 1
        %s444 = scalar_lea.sflag [#allocation4], %s443
        %s445 = sand.u32 %s230, 1
        %s446 = smul.addr %s445, 64
        %s447 = scalar_lea.vmem [#allocation10], %s446
        %p448 = pneg %p271
        %p449 = pneg %p268
        %s450 = sand.u32 %s33, 1
        %s451 = scalar_lea.sflag [#allocation12], %s450
        %s452 = sand.u32 %s258, 1
        %s453 = smul.addr %s452, 64
        %s454 = scalar_lea.vmem [#allocation11], %s453
        %p455 = pneg %p299
        %p456 = pneg %p296
        %s457 = sand.u32 %s33, 1
        %s458 = scalar_lea.sflag [#allocation12], %s457
        %s459 = sand.u32 %s286, 1
        %s460 = smul.addr %s459, 64
        %s461 = scalar_lea.vmem [#allocation13], %s460
        %s462 = smul.u32 16, %s38
        %s463 = smul.u32 16, %s38
        %s464 = smul.u32 16, %s38
        %s465 = smul.u32 16, %s38
        %v467 = vld [vmem:[%s403] sm:$0xff]
        %v468 = vld [vmem:[%s403 + $0x8] sm:$0xff]
        %v469 = vld [vmem:[%s403 + $0x10] sm:$0xff]
        %v470 = vld [vmem:[%s403 + $0x18] sm:$0xff]
        %v471 = vld [vmem:[%s403 + $0x20] sm:$0xff]
        %v472 = vld [vmem:[%s403 + $0x28] sm:$0xff]
        %v473 = vld [vmem:[%s403 + $0x30] sm:$0xff]
        %v474 = vld [vmem:[%s403 + $0x38] sm:$0xff]
        %v475 = vld [vmem:[%s403 + $0x40] sm:$0xff]
        %v476 = vld [vmem:[%s403 + $0x48] sm:$0xff]
        %v477 = vld [vmem:[%s403 + $0x50] sm:$0xff]
        %v478 = vld [vmem:[%s403 + $0x58] sm:$0xff]
        %v479 = vld [vmem:[%s403 + $0x60] sm:$0xff]
        %v480 = vld [vmem:[%s403 + $0x68] sm:$0xff]
        %v481 = vld [vmem:[%s403 + $0x70] sm:$0xff]
        %v482 = vld [vmem:[%s403 + $0x78] sm:$0xff]
        %v483 = vld [vmem:[%s1] sm:$0x1]
        %v484 = vld [vmem:[%s2] sm:$0x1]
        %485 = vadd.xlane.f32.xlu0 %v467
        %v486 = vpop.xlane.xlu0 %485
        %487 = vadd.xlane.f32.xlu0 %v468
        %v488 = vpop.xlane.xlu0 %487
        %489 = vadd.xlane.f32.xlu0 %v469
        %v490 = vpop.xlane.xlu0 %489
        %491 = vadd.xlane.f32.xlu0 %v470
        %v492 = vpop.xlane.xlu0 %491
        %493 = vadd.xlane.f32.xlu0 %v471
        %v494 = vpop.xlane.xlu0 %493
        %495 = vadd.xlane.f32.xlu0 %v472
        %v496 = vpop.xlane.xlu0 %495
        %497 = vadd.xlane.f32.xlu0 %v473
        %v498 = vpop.xlane.xlu0 %497
        %499 = vadd.xlane.f32.xlu0 %v474
        %v500 = vpop.xlane.xlu0 %499
        %501 = vadd.xlane.f32.xlu0 %v475
        %v502 = vpop.xlane.xlu0 %501
        %503 = vadd.xlane.f32.xlu0 %v476
        %v504 = vpop.xlane.xlu0 %503
        %505 = vadd.xlane.f32.xlu0 %v477
        %v506 = vpop.xlane.xlu0 %505
        %507 = vadd.xlane.f32.xlu0 %v478
        %v508 = vpop.xlane.xlu0 %507
        %509 = vadd.xlane.f32.xlu0 %v479
        %v510 = vpop.xlane.xlu0 %509
        %511 = vadd.xlane.f32.xlu0 %v480
        %v512 = vpop.xlane.xlu0 %511
        %513 = vadd.xlane.f32.xlu0 %v481
        %v514 = vpop.xlane.xlu0 %513
        %515 = vadd.xlane.f32.xlu0 %v482
        %v516 = vpop.xlane.xlu0 %515
        %v517 = vrcp.pop 128.0
        %v518 = vmul.f32 %v486, %v517
        %v519 = vmul.f32 %v488, %v517
        %v520 = vmul.f32 %v490, %v517
        %v521 = vmul.f32 %v492, %v517
        %v522 = vmul.f32 %v494, %v517
        %v523 = vmul.f32 %v496, %v517
        %v524 = vmul.f32 %v498, %v517
        %v525 = vmul.f32 %v500, %v517
        %v526 = vmul.f32 %v502, %v517
        %v527 = vmul.f32 %v504, %v517
        %v528 = vmul.f32 %v506, %v517
        %v529 = vmul.f32 %v508, %v517
        %v530 = vmul.f32 %v510, %v517
        %v531 = vmul.f32 %v512, %v517
        %v532 = vmul.f32 %v514, %v517
        %v533 = vmul.f32 %v516, %v517
        %v534 = vsub.f32 %v467, %v518
        %v535 = vsub.f32 %v468, %v519
        %v536 = vsub.f32 %v469, %v520
        %v537 = vsub.f32 %v470, %v521
        %v538 = vsub.f32 %v471, %v522
        %v539 = vsub.f32 %v472, %v523
        %v540 = vsub.f32 %v473, %v524
        %v541 = vsub.f32 %v474, %v525
        %v542 = vsub.f32 %v475, %v526
        %v543 = vsub.f32 %v476, %v527
        %v544 = vsub.f32 %v477, %v528
        %v545 = vsub.f32 %v478, %v529
        %v546 = vsub.f32 %v479, %v530
        %v547 = vsub.f32 %v480, %v531
        %v548 = vsub.f32 %v481, %v532
        %v549 = vsub.f32 %v482, %v533
        %v550 = vmul.f32 %v534, %v534
        %v551 = vmul.f32 %v535, %v535
        %v552 = vmul.f32 %v536, %v536
        %v553 = vmul.f32 %v537, %v537
        %v554 = vmul.f32 %v538, %v538
        %v555 = vmul.f32 %v539, %v539
        %v556 = vmul.f32 %v540, %v540
        %v557 = vmul.f32 %v541, %v541
        %v558 = vmul.f32 %v542, %v542
        %v559 = vmul.f32 %v543, %v543
        %v560 = vmul.f32 %v544, %v544
        %v561 = vmul.f32 %v545, %v545
        %v562 = vmul.f32 %v546, %v546
        %v563 = vmul.f32 %v547, %v547
        %v564 = vmul.f32 %v548, %v548
        %v565 = vmul.f32 %v549, %v549
        %566 = vadd.xlane.f32.xlu0 %v550
        %v567 = vpop.xlane.xlu0 %566
        %568 = vadd.xlane.f32.xlu0 %v551
        %v569 = vpop.xlane.xlu0 %568
        %570 = vadd.xlane.f32.xlu0 %v552
        %v571 = vpop.xlane.xlu0 %570
        %572 = vadd.xlane.f32.xlu0 %v553
        %v573 = vpop.xlane.xlu0 %572
        %574 = vadd.xlane.f32.xlu0 %v554
        %v575 = vpop.xlane.xlu0 %574
        %576 = vadd.xlane.f32.xlu0 %v555
        %v577 = vpop.xlane.xlu0 %576
        %578 = vadd.xlane.f32.xlu0 %v556
        %v579 = vpop.xlane.xlu0 %578
        %580 = vadd.xlane.f32.xlu0 %v557
        %v581 = vpop.xlane.xlu0 %580
        %582 = vadd.xlane.f32.xlu0 %v558
        %v583 = vpop.xlane.xlu0 %582
        %584 = vadd.xlane.f32.xlu0 %v559
        %v585 = vpop.xlane.xlu0 %584
        %586 = vadd.xlane.f32.xlu0 %v560
        %v587 = vpop.xlane.xlu0 %586
        %588 = vadd.xlane.f32.xlu0 %v561
        %v589 = vpop.xlane.xlu0 %588
        %590 = vadd.xlane.f32.xlu0 %v562
        %v591 = vpop.xlane.xlu0 %590
        %592 = vadd.xlane.f32.xlu0 %v563
        %v593 = vpop.xlane.xlu0 %592
        %594 = vadd.xlane.f32.xlu0 %v564
        %v595 = vpop.xlane.xlu0 %594
        %596 = vadd.xlane.f32.xlu0 %v565
        %v597 = vpop.xlane.xlu0 %596
        %v598 = vmul.f32 %v567, %v517
        %v599 = vmul.f32 %v569, %v517
        %v600 = vmul.f32 %v571, %v517
        %v601 = vmul.f32 %v573, %v517
        %v602 = vmul.f32 %v575, %v517
        %v603 = vmul.f32 %v577, %v517
        %v604 = vmul.f32 %v579, %v517
        %v605 = vmul.f32 %v581, %v517
        %v606 = vmul.f32 %v583, %v517
        %v607 = vmul.f32 %v585, %v517
        %v608 = vmul.f32 %v587, %v517
        %v609 = vmul.f32 %v589, %v517
        %v610 = vmul.f32 %v591, %v517
        %v611 = vmul.f32 %v593, %v517
        %v612 = vmul.f32 %v595, %v517
        %v613 = vmul.f32 %v597, %v517
        %v614 = vadd.f32 %v598, 1e-05
        %v615 = vadd.f32 %v599, 1e-05
        %v616 = vadd.f32 %v600, 1e-05
        %v617 = vadd.f32 %v601, 1e-05
        %v618 = vadd.f32 %v602, 1e-05
        %v619 = vadd.f32 %v603, 1e-05
        %v620 = vadd.f32 %v604, 1e-05
        %v621 = vadd.f32 %v605, 1e-05
        %v622 = vadd.f32 %v606, 1e-05
        %v623 = vadd.f32 %v607, 1e-05
        %v624 = vadd.f32 %v608, 1e-05
        %v625 = vadd.f32 %v609, 1e-05
        %v626 = vadd.f32 %v610, 1e-05
        %v627 = vadd.f32 %v611, 1e-05
        %v628 = vadd.f32 %v612, 1e-05
        %v629 = vadd.f32 %v613, 1e-05
        %v630 = vrsqrt.pop %v614
        %v631 = vrsqrt.pop %v615
        %v632 = vrsqrt.pop %v616
        %v633 = vrsqrt.pop %v617
        %v634 = vrsqrt.pop %v618
        %v635 = vrsqrt.pop %v619
        %v636 = vrsqrt.pop %v620
        %v637 = vrsqrt.pop %v621
        %v638 = vrsqrt.pop %v622
        %v639 = vrsqrt.pop %v623
        %v640 = vrsqrt.pop %v624
        %v641 = vrsqrt.pop %v625
        %v642 = vrsqrt.pop %v626
        %v643 = vrsqrt.pop %v627
        %v644 = vrsqrt.pop %v628
        %v645 = vrsqrt.pop %v629
        %v646 = vmul.f32 %v534, %v630
        %v647 = vmul.f32 %v535, %v631
        %v648 = vmul.f32 %v536, %v632
        %v649 = vmul.f32 %v537, %v633
        %v650 = vmul.f32 %v538, %v634
        %v651 = vmul.f32 %v539, %v635
        %v652 = vmul.f32 %v540, %v636
        %v653 = vmul.f32 %v541, %v637
        %v654 = vmul.f32 %v542, %v638
        %v655 = vmul.f32 %v543, %v639
        %v656 = vmul.f32 %v544, %v640
        %v657 = vmul.f32 %v545, %v641
        %v658 = vmul.f32 %v546, %v642
        %v659 = vmul.f32 %v547, %v643
        %v660 = vmul.f32 %v548, %v644
        %v661 = vmul.f32 %v549, %v645
        %v663 = vlaneseq
        %v664 = vshrl.u32 %v663, 7
        %v665 = vsub.s32 0, %v664
        %v666 = vrot.slane %v483, %v665
        %v668 = vmul.f32 %v646, %v666
        %v669 = vmul.f32 %v647, %v666
        %v670 = vmul.f32 %v648, %v666
        %v671 = vmul.f32 %v649, %v666
        %v672 = vmul.f32 %v650, %v666
        %v673 = vmul.f32 %v651, %v666
        %v674 = vmul.f32 %v652, %v666
        %v675 = vmul.f32 %v653, %v666
        %v676 = vmul.f32 %v654, %v666
        %v677 = vmul.f32 %v655, %v666
        %v678 = vmul.f32 %v656, %v666
        %v679 = vmul.f32 %v657, %v666
        %v680 = vmul.f32 %v658, %v666
        %v681 = vmul.f32 %v659, %v666
        %v682 = vmul.f32 %v660, %v666
        %v683 = vmul.f32 %v661, %v666
        %v685 = vlaneseq
        %v686 = vshrl.u32 %v685, 7
        %v687 = vsub.s32 0, %v686
        %v688 = vrot.slane %v484, %v687
        %v690 = vadd.f32 %v668, %v688
        %v691 = vadd.f32 %v669, %v688
        %v692 = vadd.f32 %v670, %v688
        %v693 = vadd.f32 %v671, %v688
        %v694 = vadd.f32 %v672, %v688
        %v695 = vadd.f32 %v673, %v688
        %v696 = vadd.f32 %v674, %v688
        %v697 = vadd.f32 %v675, %v688
        %v698 = vadd.f32 %v676, %v688
        %v699 = vadd.f32 %v677, %v688
        %v700 = vadd.f32 %v678, %v688
        %v701 = vadd.f32 %v679, %v688
        %v702 = vadd.f32 %v680, %v688
        %v703 = vadd.f32 %v681, %v688
        %v704 = vadd.f32 %v682, %v688
        %v705 = vadd.f32 %v683, %v688
        %v706 = vpack.c.bf16 %v691, %v690
        %v707 = vpack.c.bf16 %v693, %v692
        %v708 = vpack.c.bf16 %v695, %v694
        %v709 = vpack.c.bf16 %v697, %v696
        %v710 = vpack.c.bf16 %v699, %v698
        %v711 = vpack.c.bf16 %v701, %v700
        %v712 = vpack.c.bf16 %v703, %v702
        %v713 = vpack.c.bf16 %v705, %v704
        %v714 = vld [vmem:[#allocation5] sm:$0xf]
        %v715 = vld [vmem:[#allocation5 + $0x4] sm:$0xf]
        %v716 = vld [vmem:[#allocation5 + $0x8] sm:$0xf]
        %v717 = vld [vmem:[#allocation5 + $0xc] sm:$0xf]
        %v718 = vld [vmem:[#allocation5 + $0x10] sm:$0xf]
        %v719 = vld [vmem:[#allocation5 + $0x14] sm:$0xf]
        %v720 = vld [vmem:[#allocation5 + $0x18] sm:$0xf]
        %v721 = vld [vmem:[#allocation5 + $0x1c] sm:$0xf]
        %v722 = vld [vmem:[#allocation5 + $0x20] sm:$0xf]
        %v723 = vld [vmem:[#allocation5 + $0x24] sm:$0xf]
        %v724 = vld [vmem:[#allocation5 + $0x28] sm:$0xf]
        %v725 = vld [vmem:[#allocation5 + $0x2c] sm:$0xf]
        %v726 = vld [vmem:[#allocation5 + $0x30] sm:$0xf]
        %v727 = vld [vmem:[#allocation5 + $0x34] sm:$0xf]
        %v728 = vld [vmem:[#allocation5 + $0x38] sm:$0xf]
        %v729 = vld [vmem:[#allocation5 + $0x3c] sm:$0xf]
        %v730 = vld [vmem:[%s4] sm:$0x1]
        %v732 = vlaneseq
        %v733 = vshrl.u32 %v732, 7
        %v734 = vsub.s32 0, %v733
        %v735 = vrot.slane %v730, %v734
        %v753 = vunpack.c.l.b16 %v714
        %v754 = vunpack.c.l.b16 %v715
        %v755 = vunpack.c.l.b16 %v716
        %v756 = vunpack.c.l.b16 %v717
        %v757 = vunpack.c.l.b16 %v718
        %v758 = vunpack.c.l.b16 %v719
        %v759 = vunpack.c.l.b16 %v720
        %v760 = vunpack.c.l.b16 %v721
        %v761 = vunpack.c.l.b16 %v722
        %v762 = vunpack.c.l.b16 %v723
        %v763 = vunpack.c.l.b16 %v724
        %v764 = vunpack.c.l.b16 %v725
        %v765 = vunpack.c.l.b16 %v726
        %v766 = vunpack.c.l.b16 %v727
        %v767 = vunpack.c.l.b16 %v728
        %v768 = vunpack.c.l.b16 %v729
        %v769 = vpack.c.b16 %v754, %v753
        %v770 = vpack.c.b16 %v756, %v755
        %v771 = vpack.c.b16 %v758, %v757
        %v772 = vpack.c.b16 %v760, %v759
        %v773 = vpack.c.b16 %v762, %v761
        %v774 = vpack.c.b16 %v764, %v763
        %v775 = vpack.c.b16 %v766, %v765
        %v776 = vpack.c.b16 %v768, %v767
        %785 = vmatprep.subr.bf16.mxu0 0
        %786 = vmatpush1.bf16.msra.mxu0 %v769
        %787 = vmatprep.subr.bf16.mxu0 0
        %788 = vmatpush1.bf16.msra.mxu0 %v770
        %789 = vmatprep.subr.bf16.mxu0 0
        %790 = vmatpush1.bf16.msra.mxu0 %v771
        %791 = vmatprep.subr.bf16.mxu0 0
        %792 = vmatpush1.bf16.msra.mxu0 %v772
        %793 = vmatprep.subr.bf16.mxu0 0
        %794 = vmatpush1.bf16.msra.mxu0 %v773
        %795 = vmatprep.subr.bf16.mxu0 0
        %796 = vmatpush1.bf16.msra.mxu0 %v774
        %797 = vmatprep.subr.bf16.mxu0 0
        %798 = vmatpush1.bf16.msra.mxu0 %v775
        %799 = vmatprep.subr.bf16.mxu0 0
        %800 = vmatpush1.bf16.msra.mxu0 %v776
        %801 = vmatprep.subr.bf16.mxu0 0
        %802 = vmatpush1.bf16.msra.mxu0 0
        %803 = vmatprep.subr.bf16.mxu0 0
        %804 = vmatpush1.bf16.msra.mxu0 0
        %805 = vmatprep.subr.bf16.mxu0 0
        %806 = vmatpush1.bf16.msra.mxu0 0
        %807 = vmatprep.subr.bf16.mxu0 0
        %808 = vmatpush1.bf16.msra.mxu0 0
        %809 = vmatprep.subr.bf16.mxu0 0
        %810 = vmatpush1.bf16.msra.mxu0 0
        %811 = vmatprep.subr.bf16.mxu0 0
        %812 = vmatpush1.bf16.msra.mxu0 0
        %813 = vmatprep.subr.bf16.mxu0 0
        %814 = vmatpush1.bf16.msra.mxu0 0
        %815 = vmatprep.subr.bf16.mxu0 0
        %816 = vmatpush1.bf16.msra.mxu0 0
        %817 = vmatprep.mubr.bf16.mxu0 0
        %818 = vmatmul.mubr.bf16.gmra.mrb[0].mxu0 %v706
        %v819 = vpop.f32.mrb[0].mxu0
        %v820 = vadd.f32 %v735, %v819
        %v821 = vpop.f32.mrb[0].mxu0
        %v822 = vpop.f32.mrb[0].mxu0
        %v823 = vadd.f32 %v735, %v822
        %v824 = vpop.f32.mrb[0].mxu0
        %825 = vmatprep.mubr.bf16.mxu0 0
        %826 = vmatmul.mubr.bf16.gmra.mrb[0].mxu0 %v707
        %v827 = vpop.f32.mrb[0].mxu0
        %v828 = vadd.f32 %v735, %v827
        %v829 = vpop.f32.mrb[0].mxu0
        %v830 = vpop.f32.mrb[0].mxu0
        %v831 = vadd.f32 %v735, %v830
        %v832 = vpop.f32.mrb[0].mxu0
        %833 = vmatprep.mubr.bf16.mxu0 0
        %834 = vmatmul.mubr.bf16.gmra.mrb[0].mxu0 %v708
        %v835 = vpop.f32.mrb[0].mxu0
        %v836 = vadd.f32 %v735, %v835
        %v837 = vpop.f32.mrb[0].mxu0
        %v838 = vpop.f32.mrb[0].mxu0
        %v839 = vadd.f32 %v735, %v838
        %v840 = vpop.f32.mrb[0].mxu0
        %841 = vmatprep.mubr.bf16.mxu0 0
        %842 = vmatmul.mubr.bf16.gmra.mrb[0].mxu0 %v709
        %v843 = vpop.f32.mrb[0].mxu0
        %v844 = vadd.f32 %v735, %v843
        %v845 = vpop.f32.mrb[0].mxu0
        %v846 = vpop.f32.mrb[0].mxu0
        %v847 = vadd.f32 %v735, %v846
        %v848 = vpop.f32.mrb[0].mxu0
        %849 = vmatprep.mubr.bf16.mxu0 0
        %850 = vmatmul.mubr.bf16.gmra.mrb[0].mxu0 %v710
        %v851 = vpop.f32.mrb[0].mxu0
        %v852 = vadd.f32 %v735, %v851
        %v853 = vpop.f32.mrb[0].mxu0
        %v854 = vpop.f32.mrb[0].mxu0
        %v855 = vadd.f32 %v735, %v854
        %v856 = vpop.f32.mrb[0].mxu0
        %857 = vmatprep.mubr.bf16.mxu0 0
        %858 = vmatmul.mubr.bf16.gmra.mrb[0].mxu0 %v711
        %v859 = vpop.f32.mrb[0].mxu0
        %v860 = vadd.f32 %v735, %v859
        %v861 = vpop.f32.mrb[0].mxu0
        %v862 = vpop.f32.mrb[0].mxu0
        %v863 = vadd.f32 %v735, %v862
        %v864 = vpop.f32.mrb[0].mxu0
        %865 = vmatprep.mubr.bf16.mxu0 0
        %866 = vmatmul.mubr.bf16.gmra.mrb[0].mxu0 %v712
        %v867 = vpop.f32.mrb[0].mxu0
        %v868 = vadd.f32 %v735, %v867
        %v869 = vpop.f32.mrb[0].mxu0
        %v870 = vpop.f32.mrb[0].mxu0
        %v871 = vadd.f32 %v735, %v870
        %v872 = vpop.f32.mrb[0].mxu0
        %873 = vmatprep.mubr.bf16.mxu0 0
        %874 = vmatmul.mubr.bf16.gmra.mrb[0].mxu0 %v713
        %v875 = vpop.f32.mrb[0].mxu0
        %v876 = vadd.f32 %v735, %v875
        %v877 = vpop.f32.mrb[0].mxu0
        %v878 = vpop.f32.mrb[0].mxu0
        %v879 = vadd.f32 %v735, %v878
        %v880 = vpop.f32.mrb[0].mxu0
        %881 = vdwg.mxu0
        %v882 = vld [vmem:[#allocation7] sm:$0xf]
        %v883 = vld [vmem:[#allocation7 + $0x4] sm:$0xf]
        %v884 = vld [vmem:[#allocation7 + $0x8] sm:$0xf]
        %v885 = vld [vmem:[#allocation7 + $0xc] sm:$0xf]
        %v886 = vld [vmem:[#allocation7 + $0x10] sm:$0xf]
        %v887 = vld [vmem:[#allocation7 + $0x14] sm:$0xf]
        %v888 = vld [vmem:[#allocation7 + $0x18] sm:$0xf]
        %v889 = vld [vmem:[#allocation7 + $0x1c] sm:$0xf]
        %v890 = vld [vmem:[#allocation7 + $0x20] sm:$0xf]
        %v891 = vld [vmem:[#allocation7 + $0x24] sm:$0xf]
        %v892 = vld [vmem:[#allocation7 + $0x28] sm:$0xf]
        %v893 = vld [vmem:[#allocation7 + $0x2c] sm:$0xf]
        %v894 = vld [vmem:[#allocation7 + $0x30] sm:$0xf]
        %v895 = vld [vmem:[#allocation7 + $0x34] sm:$0xf]
        %v896 = vld [vmem:[#allocation7 + $0x38] sm:$0xf]
        %v897 = vld [vmem:[#allocation7 + $0x3c] sm:$0xf]
        %v914 = vunpack.c.l.b16 %v882
        %v915 = vunpack.c.l.b16 %v883
        %v916 = vunpack.c.l.b16 %v884
        %v917 = vunpack.c.l.b16 %v885
        %v918 = vunpack.c.l.b16 %v886
        %v919 = vunpack.c.l.b16 %v887
        %v920 = vunpack.c.l.b16 %v888
        %v921 = vunpack.c.l.b16 %v889
        %v922 = vunpack.c.l.b16 %v890
        %v923 = vunpack.c.l.b16 %v891
        %v924 = vunpack.c.l.b16 %v892
        %v925 = vunpack.c.l.b16 %v893
        %v926 = vunpack.c.l.b16 %v894
        %v927 = vunpack.c.l.b16 %v895
        %v928 = vunpack.c.l.b16 %v896
        %v929 = vunpack.c.l.b16 %v897
        %v930 = vpack.c.b16 %v915, %v914
        %v931 = vpack.c.b16 %v917, %v916
        %v932 = vpack.c.b16 %v919, %v918
        %v933 = vpack.c.b16 %v921, %v920
        %v934 = vpack.c.b16 %v923, %v922
        %v935 = vpack.c.b16 %v925, %v924
        %v936 = vpack.c.b16 %v927, %v926
        %v937 = vpack.c.b16 %v929, %v928
        %946 = vmatprep.subr.bf16.mxu0 0
        %947 = vmatpush1.bf16.msra.mxu0 %v930
        %948 = vmatprep.subr.bf16.mxu0 0
        %949 = vmatpush1.bf16.msra.mxu0 %v931
        %950 = vmatprep.subr.bf16.mxu0 0
        %951 = vmatpush1.bf16.msra.mxu0 %v932
        %952 = vmatprep.subr.bf16.mxu0 0
        %953 = vmatpush1.bf16.msra.mxu0 %v933
        %954 = vmatprep.subr.bf16.mxu0 0
        %955 = vmatpush1.bf16.msra.mxu0 %v934
        %956 = vmatprep.subr.bf16.mxu0 0
        %957 = vmatpush1.bf16.msra.mxu0 %v935
        %958 = vmatprep.subr.bf16.mxu0 0
        %959 = vmatpush1.bf16.msra.mxu0 %v936
        %960 = vmatprep.subr.bf16.mxu0 0
        %961 = vmatpush1.bf16.msra.mxu0 %v937
        %962 = vmatprep.subr.bf16.mxu0 0
        %963 = vmatpush1.bf16.msra.mxu0 0
        %964 = vmatprep.subr.bf16.mxu0 0
        %965 = vmatpush1.bf16.msra.mxu0 0
        %966 = vmatprep.subr.bf16.mxu0 0
        %967 = vmatpush1.bf16.msra.mxu0 0
        %968 = vmatprep.subr.bf16.mxu0 0
        %969 = vmatpush1.bf16.msra.mxu0 0
        %970 = vmatprep.subr.bf16.mxu0 0
        %971 = vmatpush1.bf16.msra.mxu0 0
        %972 = vmatprep.subr.bf16.mxu0 0
        %973 = vmatpush1.bf16.msra.mxu0 0
        %974 = vmatprep.subr.bf16.mxu0 0
        %975 = vmatpush1.bf16.msra.mxu0 0
        %976 = vmatprep.subr.bf16.mxu0 0
        %977 = vmatpush1.bf16.msra.mxu0 0
        %978 = vmatprep.mubr.bf16.mxu0 0
        %979 = vmatmul.mubr.bf16.gmra.mrb[0].mxu0 %v706
        %v980 = vpop.f32.mrb[0].mxu0
        %v981 = vadd.f32 0.0, %v980
        %v982 = vpop.f32.mrb[0].mxu0
        %v983 = vpop.f32.mrb[0].mxu0
        %v984 = vadd.f32 0.0, %v983
        %v985 = vpop.f32.mrb[0].mxu0
        %986 = vmatprep.mubr.bf16.mxu0 0
        %987 = vmatmul.mubr.bf16.gmra.mrb[0].mxu0 %v707
        %v988 = vpop.f32.mrb[0].mxu0
        %v989 = vadd.f32 0.0, %v988
        %v990 = vpop.f32.mrb[0].mxu0
        %v991 = vpop.f32.mrb[0].mxu0
        %v992 = vadd.f32 0.0, %v991
        %v993 = vpop.f32.mrb[0].mxu0
        %994 = vmatprep.mubr.bf16.mxu0 0
        %995 = vmatmul.mubr.bf16.gmra.mrb[0].mxu0 %v708
        %v996 = vpop.f32.mrb[0].mxu0
        %v997 = vadd.f32 0.0, %v996
        %v998 = vpop.f32.mrb[0].mxu0
        %v999 = vpop.f32.mrb[0].mxu0
        %v1000 = vadd.f32 0.0, %v999
        %v1001 = vpop.f32.mrb[0].mxu0
        %1002 = vmatprep.mubr.bf16.mxu0 0
        %1003 = vmatmul.mubr.bf16.gmra.mrb[0].mxu0 %v709
        %v1004 = vpop.f32.mrb[0].mxu0
        %v1005 = vadd.f32 0.0, %v1004
        %v1006 = vpop.f32.mrb[0].mxu0
        %v1007 = vpop.f32.mrb[0].mxu0
        %v1008 = vadd.f32 0.0, %v1007
        %v1009 = vpop.f32.mrb[0].mxu0
        %1010 = vmatprep.mubr.bf16.mxu0 0
        %1011 = vmatmul.mubr.bf16.gmra.mrb[0].mxu0 %v710
        %v1012 = vpop.f32.mrb[0].mxu0
        %v1013 = vadd.f32 0.0, %v1012
        %v1014 = vpop.f32.mrb[0].mxu0
        %v1015 = vpop.f32.mrb[0].mxu0
        %v1016 = vadd.f32 0.0, %v1015
        %v1017 = vpop.f32.mrb[0].mxu0
        %1018 = vmatprep.mubr.bf16.mxu0 0
        %1019 = vmatmul.mubr.bf16.gmra.mrb[0].mxu0 %v711
        %v1020 = vpop.f32.mrb[0].mxu0
        %v1021 = vadd.f32 0.0, %v1020
        %v1022 = vpop.f32.mrb[0].mxu0
        %v1023 = vpop.f32.mrb[0].mxu0
        %v1024 = vadd.f32 0.0, %v1023
        %v1025 = vpop.f32.mrb[0].mxu0
        %1026 = vmatprep.mubr.bf16.mxu0 0
        %1027 = vmatmul.mubr.bf16.gmra.mrb[0].mxu0 %v712
        %v1028 = vpop.f32.mrb[0].mxu0
        %v1029 = vadd.f32 0.0, %v1028
        %v1030 = vpop.f32.mrb[0].mxu0
        %v1031 = vpop.f32.mrb[0].mxu0
        %v1032 = vadd.f32 0.0, %v1031
        %v1033 = vpop.f32.mrb[0].mxu0
        %1034 = vmatprep.mubr.bf16.mxu0 0
        %1035 = vmatmul.mubr.bf16.gmra.mrb[0].mxu0 %v713
        %v1036 = vpop.f32.mrb[0].mxu0
        %v1037 = vadd.f32 0.0, %v1036
        %v1038 = vpop.f32.mrb[0].mxu0
        %v1039 = vpop.f32.mrb[0].mxu0
        %v1040 = vadd.f32 0.0, %v1039
        %v1041 = vpop.f32.mrb[0].mxu0
        %1042 = vdwg.mxu0
        %v1043 = vld [vmem:[#allocation8] sm:$0xf]
        %v1044 = vld [vmem:[#allocation8 + $0x4] sm:$0xf]
        %v1045 = vld [vmem:[#allocation8 + $0x8] sm:$0xf]
        %v1046 = vld [vmem:[#allocation8 + $0xc] sm:$0xf]
        %v1047 = vld [vmem:[#allocation8 + $0x10] sm:$0xf]
        %v1048 = vld [vmem:[#allocation8 + $0x14] sm:$0xf]
        %v1049 = vld [vmem:[#allocation8 + $0x18] sm:$0xf]
        %v1050 = vld [vmem:[#allocation8 + $0x1c] sm:$0xf]
        %v1051 = vld [vmem:[#allocation8 + $0x20] sm:$0xf]
        %v1052 = vld [vmem:[#allocation8 + $0x24] sm:$0xf]
        %v1053 = vld [vmem:[#allocation8 + $0x28] sm:$0xf]
        %v1054 = vld [vmem:[#allocation8 + $0x2c] sm:$0xf]
        %v1055 = vld [vmem:[#allocation8 + $0x30] sm:$0xf]
        %v1056 = vld [vmem:[#allocation8 + $0x34] sm:$0xf]
        %v1057 = vld [vmem:[#allocation8 + $0x38] sm:$0xf]
        %v1058 = vld [vmem:[#allocation8 + $0x3c] sm:$0xf]
        %v1059 = vld [vmem:[%s7] sm:$0x1]
        %v1061 = vlaneseq
        %v1062 = vshrl.u32 %v1061, 7
        %v1063 = vsub.s32 0, %v1062
        %v1064 = vrot.slane %v1059, %v1063
        %v1082 = vunpack.c.l.b16 %v1043
        %v1083 = vunpack.c.l.b16 %v1044
        %v1084 = vunpack.c.l.b16 %v1045
        %v1085 = vunpack.c.l.b16 %v1046
        %v1086 = vunpack.c.l.b16 %v1047
        %v1087 = vunpack.c.l.b16 %v1048
        %v1088 = vunpack.c.l.b16 %v1049
        %v1089 = vunpack.c.l.b16 %v1050
        %v1090 = vunpack.c.l.b16 %v1051
        %v1091 = vunpack.c.l.b16 %v1052
        %v1092 = vunpack.c.l.b16 %v1053
        %v1093 = vunpack.c.l.b16 %v1054
        %v1094 = vunpack.c.l.b16 %v1055
        %v1095 = vunpack.c.l.b16 %v1056
        %v1096 = vunpack.c.l.b16 %v1057
        %v1097 = vunpack.c.l.b16 %v1058
        %v1098 = vpack.c.b16 %v1083, %v1082
        %v1099 = vpack.c.b16 %v1085, %v1084
        %v1100 = vpack.c.b16 %v1087, %v1086
        %v1101 = vpack.c.b16 %v1089, %v1088
        %v1102 = vpack.c.b16 %v1091, %v1090
        %v1103 = vpack.c.b16 %v1093, %v1092
        %v1104 = vpack.c.b16 %v1095, %v1094
        %v1105 = vpack.c.b16 %v1097, %v1096
        %1114 = vmatprep.subr.bf16.mxu0 0
        %1115 = vmatpush1.bf16.msra.mxu0 %v1098
        %1116 = vmatprep.subr.bf16.mxu0 0
        %1117 = vmatpush1.bf16.msra.mxu0 %v1099
        %1118 = vmatprep.subr.bf16.mxu0 0
        %1119 = vmatpush1.bf16.msra.mxu0 %v1100
        %1120 = vmatprep.subr.bf16.mxu0 0
        %1121 = vmatpush1.bf16.msra.mxu0 %v1101
        %1122 = vmatprep.subr.bf16.mxu0 0
        %1123 = vmatpush1.bf16.msra.mxu0 %v1102
        %1124 = vmatprep.subr.bf16.mxu0 0
        %1125 = vmatpush1.bf16.msra.mxu0 %v1103
        %1126 = vmatprep.subr.bf16.mxu0 0
        %1127 = vmatpush1.bf16.msra.mxu0 %v1104
        %1128 = vmatprep.subr.bf16.mxu0 0
        %1129 = vmatpush1.bf16.msra.mxu0 %v1105
        %1130 = vmatprep.subr.bf16.mxu0 0
        %1131 = vmatpush1.bf16.msra.mxu0 0
        %1132 = vmatprep.subr.bf16.mxu0 0
        %1133 = vmatpush1.bf16.msra.mxu0 0
        %1134 = vmatprep.subr.bf16.mxu0 0
        %1135 = vmatpush1.bf16.msra.mxu0 0
        %1136 = vmatprep.subr.bf16.mxu0 0
        %1137 = vmatpush1.bf16.msra.mxu0 0
        %1138 = vmatprep.subr.bf16.mxu0 0
        %1139 = vmatpush1.bf16.msra.mxu0 0
        %1140 = vmatprep.subr.bf16.mxu0 0
        %1141 = vmatpush1.bf16.msra.mxu0 0
        %1142 = vmatprep.subr.bf16.mxu0 0
        %1143 = vmatpush1.bf16.msra.mxu0 0
        %1144 = vmatprep.subr.bf16.mxu0 0
        %1145 = vmatpush1.bf16.msra.mxu0 0
        %1146 = vmatprep.mubr.bf16.mxu0 0
        %1147 = vmatmul.mubr.bf16.gmra.mrb[0].mxu0 %v706
        %v1148 = vpop.f32.mrb[0].mxu0
        %v1149 = vadd.f32 %v1064, %v1148
        %v1150 = vpop.f32.mrb[0].mxu0
        %v1151 = vpop.f32.mrb[0].mxu0
        %v1152 = vadd.f32 %v1064, %v1151
        %v1153 = vpop.f32.mrb[0].mxu0
        %1154 = vmatprep.mubr.bf16.mxu0 0
        %1155 = vmatmul.mubr.bf16.gmra.mrb[0].mxu0 %v707
        %v1156 = vpop.f32.mrb[0].mxu0
        %v1157 = vadd.f32 %v1064, %v1156
        %v1158 = vpop.f32.mrb[0].mxu0
        %v1159 = vpop.f32.mrb[0].mxu0
        %v1160 = vadd.f32 %v1064, %v1159
        %v1161 = vpop.f32.mrb[0].mxu0
        %1162 = vmatprep.mubr.bf16.mxu0 0
        %1163 = vmatmul.mubr.bf16.gmra.mrb[0].mxu0 %v708
        %v1164 = vpop.f32.mrb[0].mxu0
        %v1165 = vadd.f32 %v1064, %v1164
        %v1166 = vpop.f32.mrb[0].mxu0
        %v1167 = vpop.f32.mrb[0].mxu0
        %v1168 = vadd.f32 %v1064, %v1167
        %v1169 = vpop.f32.mrb[0].mxu0
        %1170 = vmatprep.mubr.bf16.mxu0 0
        %1171 = vmatmul.mubr.bf16.gmra.mrb[0].mxu0 %v709
        %v1172 = vpop.f32.mrb[0].mxu0
        %v1173 = vadd.f32 %v1064, %v1172
        %v1174 = vpop.f32.mrb[0].mxu0
        %v1175 = vpop.f32.mrb[0].mxu0
        %v1176 = vadd.f32 %v1064, %v1175
        %v1177 = vpop.f32.mrb[0].mxu0
        %1178 = vmatprep.mubr.bf16.mxu0 0
        %1179 = vmatmul.mubr.bf16.gmra.mrb[0].mxu0 %v710
        %v1180 = vpop.f32.mrb[0].mxu0
        %v1181 = vadd.f32 %v1064, %v1180
        %v1182 = vpop.f32.mrb[0].mxu0
        %v1183 = vpop.f32.mrb[0].mxu0
        %v1184 = vadd.f32 %v1064, %v1183
        %v1185 = vpop.f32.mrb[0].mxu0
        %1186 = vmatprep.mubr.bf16.mxu0 0
        %1187 = vmatmul.mubr.bf16.gmra.mrb[0].mxu0 %v711
        %v1188 = vpop.f32.mrb[0].mxu0
        %v1189 = vadd.f32 %v1064, %v1188
        %v1190 = vpop.f32.mrb[0].mxu0
        %v1191 = vpop.f32.mrb[0].mxu0
        %v1192 = vadd.f32 %v1064, %v1191
        %v1193 = vpop.f32.mrb[0].mxu0
        %1194 = vmatprep.mubr.bf16.mxu0 0
        %1195 = vmatmul.mubr.bf16.gmra.mrb[0].mxu0 %v712
        %v1196 = vpop.f32.mrb[0].mxu0
        %v1197 = vadd.f32 %v1064, %v1196
        %v1198 = vpop.f32.mrb[0].mxu0
        %v1199 = vpop.f32.mrb[0].mxu0
        %v1200 = vadd.f32 %v1064, %v1199
        %v1201 = vpop.f32.mrb[0].mxu0
        %1202 = vmatprep.mubr.bf16.mxu0 0
        %1203 = vmatmul.mubr.bf16.gmra.mrb[0].mxu0 %v713
        %v1204 = vpop.f32.mrb[0].mxu0
        %v1205 = vadd.f32 %v1064, %v1204
        %v1206 = vpop.f32.mrb[0].mxu0
        %v1207 = vpop.f32.mrb[0].mxu0
        %v1208 = vadd.f32 %v1064, %v1207
        %v1209 = vpop.f32.mrb[0].mxu0
        %1210 = vdwg.mxu0
        %v1211 = vpack.c.bf16 %v823, %v820
        %v1212 = vpack.c.bf16 %v831, %v828
        %v1213 = vpack.c.bf16 %v839, %v836
        %v1214 = vpack.c.bf16 %v847, %v844
        %v1215 = vpack.c.bf16 %v855, %v852
        %v1216 = vpack.c.bf16 %v863, %v860
        %v1217 = vpack.c.bf16 %v871, %v868
        %v1218 = vpack.c.bf16 %v879, %v876
        %v1227 = vunpack.c.l.b16 %v1211
        %v1228 = vunpack.c.h.b16 %v1211
        %v1229 = vunpack.c.l.b16 %v1212
        %v1230 = vunpack.c.h.b16 %v1212
        %v1231 = vunpack.c.l.b16 %v1213
        %v1232 = vunpack.c.h.b16 %v1213
        %v1233 = vunpack.c.l.b16 %v1214
        %v1234 = vunpack.c.h.b16 %v1214
        %v1235 = vunpack.c.l.b16 %v1215
        %v1236 = vunpack.c.h.b16 %v1215
        %v1237 = vunpack.c.l.b16 %v1216
        %v1238 = vunpack.c.h.b16 %v1216
        %v1239 = vunpack.c.l.b16 %v1217
        %v1240 = vunpack.c.h.b16 %v1217
        %v1241 = vunpack.c.l.b16 %v1218
        %v1242 = vunpack.c.h.b16 %v1218
        %v1243 = vpack.c.b16 %v1227, %v1227
        %v1244 = vpack.c.b16 %v1228, %v1228
        %v1245 = vpack.c.b16 %v1229, %v1229
        %v1246 = vpack.c.b16 %v1230, %v1230
        %v1247 = vpack.c.b16 %v1231, %v1231
        %v1248 = vpack.c.b16 %v1232, %v1232
        %v1249 = vpack.c.b16 %v1233, %v1233
        %v1250 = vpack.c.b16 %v1234, %v1234
        %v1251 = vpack.c.b16 %v1235, %v1235
        %v1252 = vpack.c.b16 %v1236, %v1236
        %v1253 = vpack.c.b16 %v1237, %v1237
        %v1254 = vpack.c.b16 %v1238, %v1238
        %v1255 = vpack.c.b16 %v1239, %v1239
        %v1256 = vpack.c.b16 %v1240, %v1240
        %v1257 = vpack.c.b16 %v1241, %v1241
        %v1258 = vpack.c.b16 %v1242, %v1242
        %1275 = vst [vmem:[%s447] sm:$0xf] %v1243
        %1276 = vst [vmem:[%s447 + $0x4] sm:$0xf] %v1244
        %1277 = vst [vmem:[%s447 + $0x8] sm:$0xf] %v1245
        %1278 = vst [vmem:[%s447 + $0xc] sm:$0xf] %v1246
        %1279 = vst [vmem:[%s447 + $0x10] sm:$0xf] %v1247
        %1280 = vst [vmem:[%s447 + $0x14] sm:$0xf] %v1248
        %1281 = vst [vmem:[%s447 + $0x18] sm:$0xf] %v1249
        %1282 = vst [vmem:[%s447 + $0x1c] sm:$0xf] %v1250
        %1283 = vst [vmem:[%s447 + $0x20] sm:$0xf] %v1251
        %1284 = vst [vmem:[%s447 + $0x24] sm:$0xf] %v1252
        %1285 = vst [vmem:[%s447 + $0x28] sm:$0xf] %v1253
        %1286 = vst [vmem:[%s447 + $0x2c] sm:$0xf] %v1254
        %1287 = vst [vmem:[%s447 + $0x30] sm:$0xf] %v1255
        %1288 = vst [vmem:[%s447 + $0x34] sm:$0xf] %v1256
        %1289 = vst [vmem:[%s447 + $0x38] sm:$0xf] %v1257
        %1290 = vst [vmem:[%s447 + $0x3c] sm:$0xf] %v1258
        %v1291 = vpack.c.bf16 %v984, %v981
        %v1292 = vpack.c.bf16 %v992, %v989
        %v1293 = vpack.c.bf16 %v1000, %v997
        %v1294 = vpack.c.bf16 %v1008, %v1005
        %v1295 = vpack.c.bf16 %v1016, %v1013
        %v1296 = vpack.c.bf16 %v1024, %v1021
        %v1297 = vpack.c.bf16 %v1032, %v1029
        %v1298 = vpack.c.bf16 %v1040, %v1037
        %v1307 = vunpack.c.l.b16 %v1291
        %v1308 = vunpack.c.h.b16 %v1291
        %v1309 = vunpack.c.l.b16 %v1292
        %v1310 = vunpack.c.h.b16 %v1292
        %v1311 = vunpack.c.l.b16 %v1293
        %v1312 = vunpack.c.h.b16 %v1293
        %v1313 = vunpack.c.l.b16 %v1294
        %v1314 = vunpack.c.h.b16 %v1294
        %v1315 = vunpack.c.l.b16 %v1295
        %v1316 = vunpack.c.h.b16 %v1295
        %v1317 = vunpack.c.l.b16 %v1296
        %v1318 = vunpack.c.h.b16 %v1296
        %v1319 = vunpack.c.l.b16 %v1297
        %v1320 = vunpack.c.h.b16 %v1297
        %v1321 = vunpack.c.l.b16 %v1298
        %v1322 = vunpack.c.h.b16 %v1298
        %v1323 = vpack.c.b16 %v1307, %v1307
        %v1324 = vpack.c.b16 %v1308, %v1308
        %v1325 = vpack.c.b16 %v1309, %v1309
        %v1326 = vpack.c.b16 %v1310, %v1310
        %v1327 = vpack.c.b16 %v1311, %v1311
        %v1328 = vpack.c.b16 %v1312, %v1312
        %v1329 = vpack.c.b16 %v1313, %v1313
        %v1330 = vpack.c.b16 %v1314, %v1314
        %v1331 = vpack.c.b16 %v1315, %v1315
        %v1332 = vpack.c.b16 %v1316, %v1316
        %v1333 = vpack.c.b16 %v1317, %v1317
        %v1334 = vpack.c.b16 %v1318, %v1318
        %v1335 = vpack.c.b16 %v1319, %v1319
        %v1336 = vpack.c.b16 %v1320, %v1320
        %v1337 = vpack.c.b16 %v1321, %v1321
        %v1338 = vpack.c.b16 %v1322, %v1322
        %1355 = vst [vmem:[%s454] sm:$0xf] %v1323
        %1356 = vst [vmem:[%s454 + $0x4] sm:$0xf] %v1324
        %1357 = vst [vmem:[%s454 + $0x8] sm:$0xf] %v1325
        %1358 = vst [vmem:[%s454 + $0xc] sm:$0xf] %v1326
        %1359 = vst [vmem:[%s454 + $0x10] sm:$0xf] %v1327
        %1360 = vst [vmem:[%s454 + $0x14] sm:$0xf] %v1328
        %1361 = vst [vmem:[%s454 + $0x18] sm:$0xf] %v1329
        %1362 = vst [vmem:[%s454 + $0x1c] sm:$0xf] %v1330
        %1363 = vst [vmem:[%s454 + $0x20] sm:$0xf] %v1331
        %1364 = vst [vmem:[%s454 + $0x24] sm:$0xf] %v1332
        %1365 = vst [vmem:[%s454 + $0x28] sm:$0xf] %v1333
        %1366 = vst [vmem:[%s454 + $0x2c] sm:$0xf] %v1334
        %1367 = vst [vmem:[%s454 + $0x30] sm:$0xf] %v1335
        %1368 = vst [vmem:[%s454 + $0x34] sm:$0xf] %v1336
        %1369 = vst [vmem:[%s454 + $0x38] sm:$0xf] %v1337
        %1370 = vst [vmem:[%s454 + $0x3c] sm:$0xf] %v1338
        %v1371 = vpack.c.bf16 %v1152, %v1149
        %v1372 = vpack.c.bf16 %v1160, %v1157
        %v1373 = vpack.c.bf16 %v1168, %v1165
        %v1374 = vpack.c.bf16 %v1176, %v1173
        %v1375 = vpack.c.bf16 %v1184, %v1181
        %v1376 = vpack.c.bf16 %v1192, %v1189
        %v1377 = vpack.c.bf16 %v1200, %v1197
        %v1378 = vpack.c.bf16 %v1208, %v1205
        %v1387 = vunpack.c.l.b16 %v1371
        %v1388 = vunpack.c.h.b16 %v1371
        %v1389 = vunpack.c.l.b16 %v1372
        %v1390 = vunpack.c.h.b16 %v1372
        %v1391 = vunpack.c.l.b16 %v1373
        %v1392 = vunpack.c.h.b16 %v1373
        %v1393 = vunpack.c.l.b16 %v1374
        %v1394 = vunpack.c.h.b16 %v1374
        %v1395 = vunpack.c.l.b16 %v1375
        %v1396 = vunpack.c.h.b16 %v1375
        %v1397 = vunpack.c.l.b16 %v1376
        %v1398 = vunpack.c.h.b16 %v1376
        %v1399 = vunpack.c.l.b16 %v1377
        %v1400 = vunpack.c.h.b16 %v1377
        %v1401 = vunpack.c.l.b16 %v1378
        %v1402 = vunpack.c.h.b16 %v1378
        %v1403 = vpack.c.b16 %v1387, %v1387
        %v1404 = vpack.c.b16 %v1388, %v1388
        %v1405 = vpack.c.b16 %v1389, %v1389
        %v1406 = vpack.c.b16 %v1390, %v1390
        %v1407 = vpack.c.b16 %v1391, %v1391
        %v1408 = vpack.c.b16 %v1392, %v1392
        %v1409 = vpack.c.b16 %v1393, %v1393
        %v1410 = vpack.c.b16 %v1394, %v1394
        %v1411 = vpack.c.b16 %v1395, %v1395
        %v1412 = vpack.c.b16 %v1396, %v1396
        %v1413 = vpack.c.b16 %v1397, %v1397
        %v1414 = vpack.c.b16 %v1398, %v1398
        %v1415 = vpack.c.b16 %v1399, %v1399
        %v1416 = vpack.c.b16 %v1400, %v1400
        %v1417 = vpack.c.b16 %v1401, %v1401
        %v1418 = vpack.c.b16 %v1402, %v1402
        %1435 = vst [vmem:[%s461] sm:$0xf] %v1403
        %1436 = vst [vmem:[%s461 + $0x4] sm:$0xf] %v1404
        %1437 = vst [vmem:[%s461 + $0x8] sm:$0xf] %v1405
        %1438 = vst [vmem:[%s461 + $0xc] sm:$0xf] %v1406
        %1439 = vst [vmem:[%s461 + $0x10] sm:$0xf] %v1407
        %1440 = vst [vmem:[%s461 + $0x14] sm:$0xf] %v1408
        %1441 = vst [vmem:[%s461 + $0x18] sm:$0xf] %v1409
        %1442 = vst [vmem:[%s461 + $0x1c] sm:$0xf] %v1410
        %1443 = vst [vmem:[%s461 + $0x20] sm:$0xf] %v1411
        %1444 = vst [vmem:[%s461 + $0x24] sm:$0xf] %v1412
        %1445 = vst [vmem:[%s461 + $0x28] sm:$0xf] %v1413
        %1446 = vst [vmem:[%s461 + $0x2c] sm:$0xf] %v1414
        %1447 = vst [vmem:[%s461 + $0x30] sm:$0xf] %v1415
        %1448 = vst [vmem:[%s461 + $0x34] sm:$0xf] %v1416
        %1449 = vst [vmem:[%s461 + $0x38] sm:$0xf] %v1417
        %1450 = vst [vmem:[%s461 + $0x3c] sm:$0xf] %v1418
        %s1451 = sand.u32 %s230, 1
        %s1452 = scalar_lea.sflag [#allocation4], %s1451
        %s1453 = sand.u32 %s230, 1
        %s1454 = smul.addr %s1453, 64
        %s1455 = scalar_lea.vmem [#allocation10], %s1454
        %s1456 = sand.u32 %s33, 1
        %s1457 = scalar_lea.sflag [#allocation12], %s1456
        %s1458 = sand.u32 %s258, 1
        %s1459 = smul.addr %s1458, 64
        %s1460 = scalar_lea.vmem [#allocation11], %s1459
        %s1461 = sand.u32 %s33, 1
        %s1462 = scalar_lea.sflag [#allocation12], %s1461
        %s1463 = sand.u32 %s286, 1
        %s1464 = smul.addr %s1463, 64
        %s1465 = scalar_lea.vmem [#allocation13], %s1464
        // Predicated region
        $region69: #{tpu_custom_call.1} parent=51 // pred_check
          %p1466 = pneg %p240
        $region70: #{tpu_custom_call.1} parent=51 // pred_check_branch
          %1468 = sbr.rel (%p1466) target = $region72
        $region71: #{tpu_custom_call.1} parent=51 // pred_region
          %s1469 = smul.u32 16, %s38
          %s1471 = ssub.s32 1024, 1024
          %1472 = vsyncadd %s1452, %s1471
          %s1473 = smul.addr %s37, 32
          %s1474 = sadd.s32 %s1469, %s1473
          %s1475 = smul.addr %s1474, 64
          %s1476 = scalar_lea.hbm %s8, %s1475
          %s1477 = sshll.u32 %s1455, 4
          %s1478 = int_to_ptr.vmem [resolvable:$true] %s1477
          %1483 = dma.vmem_to_hbm [thread:$0]  %s1478, 1024, %s1476, %s1452, 64, 64, 4
        $region72: #{tpu_custom_call.1} parent=51 // pred_fallthru
          _
        // Predicated region
        $region73: #{tpu_custom_call.1} parent=51 // pred_check
          %p1484 = pneg %p268
        $region74: #{tpu_custom_call.1} parent=51 // pred_check_branch
          %1486 = sbr.rel (%p1484) target = $region76
        $region75: #{tpu_custom_call.1} parent=51 // pred_region
          %s1487 = smul.u32 16, %s38
          %s1489 = ssub.s32 1024, 1024
          %1490 = vsyncadd %s1457, %s1489
          %s1491 = smul.addr %s37, 32
          %s1492 = sadd.s32 %s1487, %s1491
          %s1493 = smul.addr %s1492, 64
          %s1494 = scalar_lea.hbm %s9, %s1493
          %s1495 = sshll.u32 %s1460, 4
          %s1496 = int_to_ptr.vmem [resolvable:$true] %s1495
          %1501 = dma.vmem_to_hbm [thread:$0]  %s1496, 1024, %s1494, %s1457, 64, 64, 4
        $region76: #{tpu_custom_call.1} parent=51 // pred_fallthru
          _
        // Predicated region
        $region77: #{tpu_custom_call.1} parent=51 // pred_check
          %p1502 = pneg %p296
        $region78: #{tpu_custom_call.1} parent=51 // pred_check_branch
          %1504 = sbr.rel (%p1502) target = $region80
        $region79: #{tpu_custom_call.1} parent=51 // pred_region
          %s1505 = smul.u32 16, %s38
          %s1507 = ssub.s32 1024, 1024
          %1508 = vsyncadd %s1462, %s1507
          %s1509 = smul.addr %s37, 32
          %s1510 = sadd.s32 %s1505, %s1509
          %s1511 = smul.addr %s1510, 64
          %s1512 = scalar_lea.hbm %s10, %s1511
          %s1513 = sshll.u32 %s1465, 4
          %s1514 = int_to_ptr.vmem [resolvable:$true] %s1513
          %1519 = dma.vmem_to_hbm [thread:$0]  %s1514, 1024, %s1512, %s1462, 64, 64, 4
        $region80: #{tpu_custom_call.1} parent=51 // pred_fallthru
          _
      $region52: #{tpu_custom_call.1} parent=5 // pred_fallthru
        _
      %p1520 = scmp.le.s32.totalorder 2, %s28
      // Predicated region
      $region81: #{tpu_custom_call.1} parent=5 // pred_check
        %p1521 = pneg %p1520
      $region82: #{tpu_custom_call.1} parent=5 // pred_check_branch
        %1523 = sbr.rel (%p1521) target = $region84
      $region83: #{tpu_custom_call.1} parent=5 // pred_region
        %s1524 = ssub.s32 %s28, 2
        // Predicated region
        $region85: #{tpu_custom_call.1} parent=83 // pred_check
          %p1525 = pneg %p246
        $region86: #{tpu_custom_call.1} parent=83 // pred_check_branch
          %1527 = sbr.rel (%p1525) target = $region88
        $region87: #{tpu_custom_call.1} parent=83 // pred_region
          %s1528 = sand.u32 %s231, 1
          %s1529 = scalar_lea.sflag [#allocation4], %s1528
          %s1530 = sand.u32 %s231, 1
          %s1531 = smul.addr %s1530, 64
          %s1532 = scalar_lea.vmem [#allocation10], %s1531
          %1533 = dma.done %s1529, 1024
        $region88: #{tpu_custom_call.1} parent=83 // pred_fallthru
          _
        // Predicated region
        $region89: #{tpu_custom_call.1} parent=83 // pred_check
          %p1534 = pneg %p274
        $region90: #{tpu_custom_call.1} parent=83 // pred_check_branch
          %1536 = sbr.rel (%p1534) target = $region92
        $region91: #{tpu_custom_call.1} parent=83 // pred_region
          %s1537 = sand.u32 %s34, 1
          %s1538 = scalar_lea.sflag [#allocation12], %s1537
          %s1539 = sand.u32 %s259, 1
          %s1540 = smul.addr %s1539, 64
          %s1541 = scalar_lea.vmem [#allocation11], %s1540
          %1542 = dma.done %s1538, 1024
        $region92: #{tpu_custom_call.1} parent=83 // pred_fallthru
          _
        // Predicated region
        $region93: #{tpu_custom_call.1} parent=83 // pred_check
          %p1543 = pneg %p302
        $region94: #{tpu_custom_call.1} parent=83 // pred_check_branch
          %1545 = sbr.rel (%p1543) target = $region96
        $region95: #{tpu_custom_call.1} parent=83 // pred_region
          %s1546 = sand.u32 %s34, 1
          %s1547 = scalar_lea.sflag [#allocation12], %s1546
          %s1548 = sand.u32 %s287, 1
          %s1549 = smul.addr %s1548, 64
          %s1550 = scalar_lea.vmem [#allocation13], %s1549
          %1551 = dma.done %s1547, 1024
        $region96: #{tpu_custom_call.1} parent=83 // pred_fallthru
          _
      $region84: #{tpu_custom_call.1} parent=5 // pred_fallthru
        _
    $region6: #{tpu_custom_call.1} parent=1 // loop_footer
      %s32 = sadd.s32 1, %s28
    $region7: #{tpu_custom_call.1} parent=1 // loop_footer_branch
      %27 = sbr.rel target = $region3
    $region8: #{tpu_custom_call.1} parent=1 // loop_exit
      _
    %1552 = vsyncpa [#allocation3], 1
    %s1553 = scalar_lea.sflag [#allocation3], 1
    %1554 = vsyncpa %s1553, 1
    %1555 = vsyncpa [#allocation6], 1
    %1556 = vsyncpa [#allocation9], 1
    %1557 = vsyncpa [#allocation4], 1
    %s1558 = scalar_lea.sflag [#allocation4], 1
    %1559 = vsyncpa %s1558, 1
    %1560 = vsyncpa [#allocation12], 1
    %s1561 = scalar_lea.sflag [#allocation12], 1
    %1562 = vsyncpa %s1561, 1

</llo_original>
